<compile_context>
chip_gen: v5e
topology: v5e:2x2
jax: 0.10.0
libtpu: 0.0.40
codegen_flags: <defaults>
</compile_context>

<pallas_src>
import functools

import jax
import jax.numpy as jnp
import numpy as np
from jax.experimental import pallas as pl
from jax.experimental.pallas import tpu as pltpu


def _squared_distance(z, et_ref, esq_ref):
    """d2[i,k] = ||z_i - e_k||^2 via the MXU identity, clamped at 0."""
    zsq = jnp.sum(z * z, axis=1, keepdims=True)                       # (T, 1)
    prod = jnp.dot(z, et_ref[...],
                   preferred_element_type=jnp.float32,
                   precision=jax.lax.Precision.HIGHEST)               # (T, K)
    # Cancellation can leave tiny negatives for near-duplicate points.
    return jnp.maximum(zsq + esq_ref[...] - 2.0 * prod, 0.0)


# --------------------------- Kernel A: colmax ---------------------------------
# colmax[s,0,k] = max_{i in split s} belong[i,k] * ||z_i - e_k||
def _colmax_kernel(z_ref, et_ref, esq_ref, belong_ref, colmax_ref):
    i = pl.program_id(1)

    @pl.when(i == 0)
    def _():
        colmax_ref[...] = jnp.full_like(colmax_ref, -jnp.inf)

    d2 = _squared_distance(z_ref[...], et_ref, esq_ref)
    dist = jnp.sqrt(d2)
    masked = belong_ref[...] * dist
    tile_max = jnp.max(masked, axis=0, keepdims=True)                 # (1, K)
    colmax_ref[...] = jnp.maximum(colmax_ref[...], tile_max[None])


# ----------------------- Kernel B: fused distance + LSE -----------------------
# s[i,k] = alpha * warp(d[i,k]);  lse[s,0,k] = logsumexp_{i in split s} s[i,k]
def _lse_kernel(z_ref, et_ref, esq_ref, maxdsq_ref, alpha_ref,
                lse_ref, m_sc, l_sc, *, use_warp, distance_p):
    i = pl.program_id(1)

    @pl.when(i == 0)
    def _():
        m_sc[...] = jnp.full_like(m_sc, -jnp.inf)
        l_sc[...] = jnp.zeros_like(l_sc)

    d2 = _squared_distance(z_ref[...], et_ref, esq_ref)               # (T, K)

    if use_warp:
        if distance_p == 1:
            # where(d < maxd, d**2, d**2) == d**2 -> no sqrt / pow / where.
            val = d2
        else:
            # Expressed on squared distance; compare against maxd^2.
            # NOTE: like the original torch code, both pow branches are
            # evaluated; only exercised for the tested p here.
            p = float(distance_p)
            val = jnp.where(d2 < maxdsq_ref[...], d2 ** (1.0 / p), d2 ** p)
    else:
        val = jnp.sqrt(d2)                                            # plain distance

    s = alpha_ref[0] * val                                            # SMEM scalar bcast

    m_new = jnp.maximum(m_sc[...], jnp.max(s, axis=0, keepdims=True))
    l_sc[...] = (l_sc[...] * jnp.exp(m_sc[...] - m_new)
                 + jnp.sum(jnp.exp(s - m_new), axis=0, keepdims=True))
    m_sc[...] = m_new

    @pl.when(i == pl.num_programs(1) - 1)
    def _():
        lse_ref[...] = (m_sc[...] + jnp.log(l_sc[...]))[None]


# ------------------------------- Wrapper --------------------------------------
def _pick_tile(n_rows, max_tile):
    """Largest multiple of 8 that divides n_rows and is <= max_tile."""
    best = 8
    t = 8
    lim = min(max_tile, n_rows)
    while t <= lim:
        if n_rows % t == 0:
            best = t
        t += 8
    return best


def latent_forward(data, log_sigma, max_distance_buf, distance_p=1,
                   tile_n=512, n_splits=None):
    """Mirrors Latent.forward. Returns (data_with_lse_loss, new_max_distance_buf)."""
    z_nchw = data['z']
    e = data['e']
    belong = data.get('belong', None)

    b, d_dim, h, w = z_nchw.shape
    k_dim = e.shape[0]
    k_pad = -(-k_dim // 128) * 128                      # lane-dense codebook axis
    d_pad = -(-d_dim // 8) * 8

    z = jnp.transpose(z_nchw, (0, 2, 3, 1)).reshape(-1, d_dim).astype(jnp.float32)
    if d_pad != d_dim:
        z = jnp.pad(z, ((0, 0), (0, d_pad - d_dim)))    # zero cols: norms unchanged
    n = z.shape[0]
    assert n % 8 == 0, "number of latent vectors must be a multiple of 8"

    if n_splits is None:                                # 2-way split for v7x megacore
        n_splits = 2 if n % 16 == 0 else 1
    rows_per_split = n // n_splits
    tile = _pick_tile(rows_per_split, tile_n)
    inner = rows_per_split // tile
    grid = (n_splits, inner)

    et = jnp.pad(jnp.transpose(e.astype(jnp.float32)),
                 ((0, d_pad - d_dim), (0, k_pad - k_dim)))   # (D_pad, K_pad)
    e_sq = jnp.sum(et * et, axis=0, keepdims=True)           # (1, K_pad)

    row_map = lambda s, i, _inner=inner: (s * _inner + i, 0)
    resident = lambda s, i: (0, 0)
    out_map = lambda s, i: (s, 0, 0)
    cparams = pltpu.CompilerParams(
        dimension_semantics=("parallel", "arbitrary"))

    use_belong = belong is not None
    if use_belong:
        belong_p = jnp.pad(belong.astype(jnp.float32),
                           ((0, 0), (0, k_pad - k_dim)))
        colmax_parts = pl.pallas_call(
            _colmax_kernel,
            out_shape=jax.ShapeDtypeStruct((n_splits, 1, k_pad), jnp.float32),
            grid=grid,
            in_specs=[
                pl.BlockSpec((tile, d_pad), row_map),
                pl.BlockSpec((d_pad, k_pad), resident),
                pl.BlockSpec((1, k_pad), resident),
                pl.BlockSpec((tile, k_pad), row_map),
            ],
            out_specs=pl.BlockSpec((1, 1, k_pad), out_map),
            compiler_params=cparams,
        )(z, et, e_sq, belong_p)
        colmax = jnp.max(colmax_parts, axis=0)[:, :k_dim]            # (1, K)
        # EMA buffer update (torch: self.max_distance.data = 0.999*old + 0.001*new)
        new_buf = 0.999 * max_distance_buf + (1.0 - 0.999) * colmax
        maxd = jnp.maximum(new_buf, 1e-8)                            # torch.clamp(., 1e-8)
        maxd_sq = jnp.pad(maxd * maxd, ((0, 0), (0, k_pad - k_dim)),
                          constant_values=1.0)
    else:
        new_buf = max_distance_buf
        maxd_sq = jnp.ones((1, k_pad), jnp.float32)                  # unused

    alpha = (-1.0 / (2.0 * jnp.exp(log_sigma) ** 2)).astype(jnp.float32)  # (1,)

    lse_parts = pl.pallas_call(
        functools.partial(_lse_kernel, use_warp=use_belong,
                          distance_p=distance_p),
        out_shape=jax.ShapeDtypeStruct((n_splits, 1, k_pad), jnp.float32),
        grid=grid,
        in_specs=[
            pl.BlockSpec((tile, d_pad), row_map),
            pl.BlockSpec((d_pad, k_pad), resident),
            pl.BlockSpec((1, k_pad), resident),
            pl.BlockSpec((1, k_pad), resident),
            pl.BlockSpec(memory_space=pltpu.MemorySpace.SMEM),       # alpha scalar
        ],
        out_specs=pl.BlockSpec((1, 1, k_pad), out_map),
        scratch_shapes=[pltpu.VMEM((1, k_pad), jnp.float32),
                        pltpu.VMEM((1, k_pad), jnp.float32)],
        compiler_params=cparams,
    )(z, et, e_sq, maxd_sq, alpha)

    lse = jax.scipy.special.logsumexp(lse_parts, axis=0)[:, :k_dim]  # (1, K)
    loss = -jnp.mean(lse) + d_dim * log_sigma                        # shape (1,) like torch
    out = dict(data)
    out['lse_loss'] = loss
    return out, new_buf


# --------------------------- Pure-JAX reference --------------------------------
def latent_reference(data, log_sigma, max_distance_buf, distance_p=1):
    z_nchw = data['z']
    e = data['e']
    belong = data.get('belong', None)
    b, d_dim, h, w = z_nchw.shape
    z = jnp.transpose(z_nchw, (0, 2, 3, 1)).reshape(-1, d_dim)
    distance = jnp.sqrt(jnp.sum((z[:, None, :] - e[None, :, :]) ** 2, axis=2))
    new_buf = max_distance_buf
    if belong is not None:
        colmax = jnp.max(belong * distance, axis=0, keepdims=True)
        new_buf = 0.999 * max_distance_buf + (1 - 0.999) * colmax
        maxd = jnp.maximum(new_buf, 1e-8)
        distance = jnp.where(distance < maxd,
                             distance ** (2.0 / distance_p),
                             distance ** (2.0 * distance_p))
    alpha = -1.0 / (2.0 * jnp.exp(log_sigma) ** 2)
    loss = -jnp.mean(jax.scipy.special.logsumexp(alpha * distance, axis=0))
    loss = loss + d_dim * log_sigma
    return loss, new_buf


if __name__ == "__main__":
    key = jax.random.PRNGKey(0)
    k1, k2, k3 = jax.random.split(key, 3)

    # Small shapes consistent with the module's forward.
    B, Z_DIM, H, W = 2, 4, 16, 16        # N = B*H*W = 512
    K = 32                               # n_prior_embeddings
    init_log_sigma = -1.0

    z = jax.random.normal(k1, (B, Z_DIM, H, W), dtype=jnp.float32)
    e = jax.random.normal(k2, (K, Z_DIM), dtype=jnp.float32)
    N = B * H * W
    belong = jax.nn.one_hot(
        jax.random.randint(k3, (N,), 0, K), K, dtype=jnp.float32)

    # Parameters / buffers (deterministic init, matching Latent.__init__).
    log_sigma = jnp.ones((1,), jnp.float32) * init_log_sigma
    max_distance_buf = jnp.ones((1, K), jnp.float32)

    # --- belong path (distance warp + EMA buffer update) ---
    data = {'z': z, 'e': e, 'belong': belong}
    out, new_buf = latent_forward(data, log_sigma, max_distance_buf, distance_p=1)
    loss = jax.block_until_ready(out['lse_loss'])
    new_buf = jax.block_until_ready(new_buf)

    ref_loss, ref_buf = latent_reference(data, log_sigma, max_distance_buf,
                                         distance_p=1)
    np.testing.assert_allclose(np.asarray(loss), np.asarray(ref_loss),
                               rtol=1e-4, atol=1e-4)
    np.testing.assert_allclose(np.asarray(new_buf), np.asarray(ref_buf),
                               rtol=1e-4, atol=1e-4)

    # --- no-belong path (single fused distance+LSE kernel, no colmax pass) ---
    data2 = {'z': z, 'e': e}
    out2, buf2 = latent_forward(data2, log_sigma, max_distance_buf, distance_p=1)
    loss2 = jax.block_until_ready(out2['lse_loss'])
    ref_loss2, _ = latent_reference(data2, log_sigma, max_distance_buf,
                                    distance_p=1)
    np.testing.assert_allclose(np.asarray(loss2), np.asarray(ref_loss2),
                               rtol=1e-4, atol=1e-4)

    print("KERNEL_OK")
</pallas_src>

<mosaic_0001>
module attributes {stable_mosaic.version = 11 : i64} {
  func.func @_colmax_kernel(%arg0: i32, %arg1: i32, %arg2: memref<256x8xf32, #tpu.memory_space<vmem>>, %arg3: memref<8x128xf32, #tpu.memory_space<vmem>>, %arg4: memref<1x128xf32, #tpu.memory_space<vmem>>, %arg5: memref<256x128xf32, #tpu.memory_space<vmem>>, %arg6: memref<1x1x128xf32, #tpu.memory_space<vmem>>) attributes {dimension_semantics = [#tpu.dimension_semantics<parallel>, #tpu.dimension_semantics<arbitrary>], iteration_bounds = array<i64: 2, 1>, scalar_prefetch = 0 : i64, scratch_operands = 0 : i64, tpu.core_type = #tpu.core_type<tc>, window_params = [{transform_indices = @transform_0, window_bounds = array<i64: 256, 8>}, {pipeline_mode = #tpu.pipeline_mode<synchronous>, transform_indices = @transform_1, window_bounds = array<i64: 8, 128>}, {pipeline_mode = #tpu.pipeline_mode<synchronous>, transform_indices = @transform_2, window_bounds = array<i64: 1, 128>}, {transform_indices = @transform_3, window_bounds = array<i64: 256, 128>}, {transform_indices = @transform_4, window_bounds = array<i64: 1, 1, 128>}]} {
    %c0_i32 = arith.constant 0 : i32
    %0 = arith.cmpi eq, %arg1, %c0_i32 : i32
    %1 = arith.extui %0 : i1 to i32
    %c0_i32_0 = arith.constant 0 : i32
    %2 = arith.cmpi ne, %1, %c0_i32_0 : i32
    scf.if %2 {
      %cst_18 = arith.constant 0xFF800000 : f32
      %27 = vector.broadcast %cst_18 : f32 to vector<1x1x128xf32>
      %c0_19 = arith.constant 0 : index
      %c0_20 = arith.constant 0 : index
      %c0_21 = arith.constant 0 : index
      %28 = vector.load %arg6[%c0_19, %c0_20, %c0_21] : memref<1x1x128xf32, #tpu.memory_space<vmem>>, vector<1x1x128xf32>
      tpu.vector_store %arg6[%c0_19, %c0_20, %c0_21], %27 {strides = array<i32>} : memref<1x1x128xf32, #tpu.memory_space<vmem>>, vector<1x1x128xf32>,
    } else {
    }
    %c0 = arith.constant 0 : index
    %c0_1 = arith.constant 0 : index
    %3 = vector.load %arg2[%c0, %c0_1] : memref<256x8xf32, #tpu.memory_space<vmem>>, vector<256x8xf32>
    %4 = arith.mulf %3, %3 : vector<256x8xf32>
    %cst = arith.constant dense<0.000000e+00> : vector<256xf32>
    %5 = vector.multi_reduction <add>, %4, %cst [1] : vector<256x8xf32> to vector<256xf32>
    %6 = vector.shape_cast %5 : vector<256xf32> to vector<256x1xf32>
    %c0_2 = arith.constant 0 : index
    %c0_3 = arith.constant 0 : index
    %7 = vector.load %arg3[%c0_2, %c0_3] : memref<8x128xf32, #tpu.memory_space<vmem>>, vector<8x128xf32>
    %cst_4 = arith.constant dense<0.000000e+00> : vector<256x128xf32>
    %8 = tpu.matmul %3, %7, %cst_4 {dimension_numbers = #tpu.dot_dimension_numbers<[1], [0], [0], [1], [0, 0, 1, 1], [], []>, precision = #tpu.contract_precision<fp32>} : vector<256x8xf32>, vector<8x128xf32>, vector<256x128xf32> -> vector<256x128xf32>
    %c0_5 = arith.constant 0 : index
    %c0_6 = arith.constant 0 : index
    %9 = vector.load %arg4[%c0_5, %c0_6] : memref<1x128xf32, #tpu.memory_space<vmem>>, vector<1x128xf32>
    %10 = vector.broadcast %6 : vector<256x1xf32> to vector<256x128xf32>
    %11 = vector.broadcast %9 : vector<1x128xf32> to vector<256x128xf32>
    %12 = arith.addf %10, %11 : vector<256x128xf32>
    %cst_7 = arith.constant 2.000000e+00 : f32
    %13 = vector.broadcast %cst_7 : f32 to vector<256x128xf32>
    %14 = arith.mulf %13, %8 : vector<256x128xf32>
    %15 = arith.subf %12, %14 : vector<256x128xf32>
    %cst_8 = arith.constant 0.000000e+00 : f32
    %16 = vector.broadcast %cst_8 : f32 to vector<256x128xf32>
    %17 = arith.maximumf %15, %16 : vector<256x128xf32>
    %18 = math.sqrt %17 : vector<256x128xf32>
    %c0_9 = arith.constant 0 : index
    %c0_10 = arith.constant 0 : index
    %19 = vector.load %arg5[%c0_9, %c0_10] : memref<256x128xf32, #tpu.memory_space<vmem>>, vector<256x128xf32>
    %20 = arith.mulf %19, %18 : vector<256x128xf32>
    %cst_11 = arith.constant dense<0xFF800000> : vector<128xf32>
    %21 = vector.multi_reduction <maximumf>, %20, %cst_11 [0] : vector<256x128xf32> to vector<128xf32>
    %22 = vector.shape_cast %21 : vector<128xf32> to vector<1x128xf32>
    %c0_12 = arith.constant 0 : index
    %c0_13 = arith.constant 0 : index
    %c0_14 = arith.constant 0 : index
    %23 = vector.load %arg6[%c0_12, %c0_13, %c0_14] : memref<1x1x128xf32, #tpu.memory_space<vmem>>, vector<1x1x128xf32>
    %24 = vector.shape_cast %22 : vector<1x128xf32> to vector<1x1x128xf32>
    %25 = arith.maximumf %23, %24 : vector<1x1x128xf32>
    %c0_15 = arith.constant 0 : index
    %c0_16 = arith.constant 0 : index
    %c0_17 = arith.constant 0 : index
    %26 = vector.load %arg6[%c0_15, %c0_16, %c0_17] : memref<1x1x128xf32, #tpu.memory_space<vmem>>, vector<1x1x128xf32>
    tpu.vector_store %arg6[%c0_15, %c0_16, %c0_17], %25 {strides = array<i32>} : memref<1x1x128xf32, #tpu.memory_space<vmem>>, vector<1x1x128xf32>,
    return
  }
  func.func @transform_0(%arg0: i32, %arg1: i32) -> (i32, i32) {
    %c1_i32 = arith.constant 1 : i32
    %0 = arith.muli %arg0, %c1_i32 : i32
    %1 = arith.addi %0, %arg1 : i32
    %c0_i32 = arith.constant 0 : i32
    %c0_i32_0 = arith.constant 0 : i32
    return %1, %c0_i32 : i32, i32
  }
  func.func @transform_1(%arg0: i32, %arg1: i32) -> (i32, i32) {
    %c0_i32 = arith.constant 0 : i32
    %c0_i32_0 = arith.constant 0 : i32
    %c0_i32_1 = arith.constant 0 : i32
    return %c0_i32, %c0_i32_0 : i32, i32
  }
  func.func @transform_2(%arg0: i32, %arg1: i32) -> (i32, i32) {
    %c0_i32 = arith.constant 0 : i32
    %c0_i32_0 = arith.constant 0 : i32
    %c0_i32_1 = arith.constant 0 : i32
    return %c0_i32, %c0_i32_0 : i32, i32
  }
  func.func @transform_3(%arg0: i32, %arg1: i32) -> (i32, i32) {
    %c1_i32 = arith.constant 1 : i32
    %0 = arith.muli %arg0, %c1_i32 : i32
    %1 = arith.addi %0, %arg1 : i32
    %c0_i32 = arith.constant 0 : i32
    %c0_i32_0 = arith.constant 0 : i32
    return %1, %c0_i32 : i32, i32
  }
  func.func @transform_4(%arg0: i32, %arg1: i32) -> (i32, i32, i32) {
    %c0_i32 = arith.constant 0 : i32
    %c0_i32_0 = arith.constant 0 : i32
    %c0_i32_1 = arith.constant 0 : i32
    return %arg0, %c0_i32, %c0_i32_0 : i32, i32, i32
  }
}

</mosaic_0001>

<llo_original>
// kernel: tpu_custom_call.1
$region0: #{tpu_custom_call.1}
  #allocation0 [shape = 'u32[]', space=smem, size = 0x4, offset = 0x4, fixed_abs, tag = 'smem constant byte address 0x4 - core index']
  #allocation1 [shape = 'u32[72,128]{1,0:T(1,128)}', space=vmem, size = 0x9000, scoped, tag = 'internal scratch']
  %s0 = inlined_call_operand.vmem [shape: f32[512,8], index: 0, kind: input, shape index: {}]
  %s1 = inlined_call_operand.vmem [shape: f32[8,128], index: 1, kind: input, shape index: {}]
  %s2 = inlined_call_operand.vmem [shape: f32[1,128], index: 2, kind: input, shape index: {}]
  %s3 = inlined_call_operand.vmem [shape: f32[512,128], index: 3, kind: input, shape index: {}]
  %s4 = inlined_call_operand.hbm [shape: f32[2,1,128], index: 4, kind: output, shape index: {}]
  %s5 = sld [smem:[#allocation0]]
  $region53: #{tpu_custom_call.1} parent=0
    _
  %s7 = ssub.s32 1, %s5
  %s8 = scalar_select 0, %s7, %s5
  $region1: #{tpu_custom_call.1} parent=0
    #allocation2 [shape = 'u8[1024]{0}', space=vmem, size = 0x400, scoped, tag = 'output window, operand 0']
    #allocation3 [shape = 's32[2]{0}', space=sflag, size = 0x8, scoped, tag = 'scoped memory for tpu_custom_call.1']
    %9 = vsyncpa [#allocation3], 0
    %s10 = scalar_lea.sflag [#allocation3], 1
    %11 = vsyncpa %s10, 0
    loop: start=0, step=1, limit=4
    $region2: #{tpu_custom_call.1} parent=1 // loop_pre_header
      _
    $region3: #{tpu_custom_call.1} parent=1 // loop_header
      %s13 = sphi 0, %s17
      %p14 = scmp.ge.s32.totalorder %s13, 4
      %s20 = sphi 0, %s32
      %s21 = sphi 0, %s28
      %s22 = sphi 0, %s20
      %s23 = sphi 0, %s21
      %s24 = sphi 0, %s22
      %s25 = sphi 0, %s23
      %s37 = sphi 0, %s39
      %s40 = sphi 0, %s37
      %s41 = sphi 0, %s40
      %s57 = sphi 0, %s41
      %s61 = sphi 0, %s61
      %s63 = sphi 0, %s61
      %s64 = sphi 0, %s63
      %s78 = sphi 0, %s64
      %s82 = sphi 0, %s82
      %s84 = sphi 0, %s82
      %s85 = sphi 0, %s84
      %s99 = sphi 0, %s85
      %s107 = sphi 0, %s109
      %s110 = sphi 0, %s107
      %s111 = sphi 0, %s110
      %s127 = sphi 0, %s111
      %s133 = sphi 0, %s135
      %s136 = sphi 0, %s133
      %s137 = sphi 0, %s136
      %s153 = sphi 0, %s137
    $region4: #{tpu_custom_call.1} parent=1 // loop_header_branch
      %16 = sbr.rel (%p14) target = $region8
    $region5: #{tpu_custom_call.1} parent=1 // loop_body
      %s18 = ssub.s32 %s13, 1
      %s19 = ssub.s32 %s13, 2
      %s26 = sadd.s32 1, %s21
      %p27 = scmp.ge.s32.totalorder %s26, 1
      %s28 = scalar_select %p27, 0, %s26
      %s29 = sadd.s32 1, %s20
      %s30 = scalar_select %p27, %s29, %s20
      %p31 = scmp.ge.s32.totalorder %s30, 2
      %s32 = scalar_select %p31, 0, %s30
      %s33 = sadd.s32 %s20, %s21
      %s34 = sadd.s32 %s32, %s28
      %s35 = ssub.s32 %s33, %s34
      %p36 = scmp.eq.s32.totalorder %s35, 0
      %s38 = sadd.s32 %s37, 1
      %s39 = scalar_select %p36, %s37, %s38
      %p42 = pneg %p36
      %p43 = scmp.eq.s32.totalorder %s13, 1
      %p44 = por %p42, %p43
      %p45 = scmp.ne.s32.totalorder %s37, %s40
      %p46 = scmp.eq.s32.totalorder %s13, 0
      %p47 = por %p45, %p46
      %p48 = scmp.ne.s32.totalorder %s37, %s40
      %p49 = scmp.eq.s32.totalorder %s18, 1
      %p50 = por %p48, %p49
      %p51 = scmp.ne.s32.totalorder %s40, %s41
      %p52 = scmp.eq.s32.totalorder %s18, 0
      %p53 = por %p51, %p52
      %p54 = scmp.ne.s32.totalorder %s40, %s41
      %p55 = scmp.eq.s32.totalorder %s19, 1
      %p56 = por %p54, %p55
      %p58 = scmp.ne.s32.totalorder %s41, %s57
      %p59 = scmp.eq.s32.totalorder %s19, 0
      %p60 = por %p58, %p59
      %s62 = sadd.s32 %s61, 1
      %p65 = scmp.eq.s32.totalorder %s13, 1
      %p66 = scmp.ne.s32.totalorder %s61, %s63
      %p67 = scmp.eq.s32.totalorder %s13, 0
      %p68 = por %p66, %p67
      %p69 = scmp.ne.s32.totalorder %s61, %s63
      %p70 = scmp.eq.s32.totalorder %s18, 1
      %p71 = por %p69, %p70
      %p72 = scmp.ne.s32.totalorder %s63, %s64
      %p73 = scmp.eq.s32.totalorder %s18, 0
      %p74 = por %p72, %p73
      %p75 = scmp.ne.s32.totalorder %s63, %s64
      %p76 = scmp.eq.s32.totalorder %s19, 1
      %p77 = por %p75, %p76
      %p79 = scmp.ne.s32.totalorder %s64, %s78
      %p80 = scmp.eq.s32.totalorder %s19, 0
      %p81 = por %p79, %p80
      %s83 = sadd.s32 %s82, 1
      %p86 = scmp.eq.s32.totalorder %s13, 1
      %p87 = scmp.ne.s32.totalorder %s82, %s84
      %p88 = scmp.eq.s32.totalorder %s13, 0
      %p89 = por %p87, %p88
      %p90 = scmp.ne.s32.totalorder %s82, %s84
      %p91 = scmp.eq.s32.totalorder %s18, 1
      %p92 = por %p90, %p91
      %p93 = scmp.ne.s32.totalorder %s84, %s85
      %p94 = scmp.eq.s32.totalorder %s18, 0
      %p95 = por %p93, %p94
      %p96 = scmp.ne.s32.totalorder %s84, %s85
      %p97 = scmp.eq.s32.totalorder %s19, 1
      %p98 = por %p96, %p97
      %p100 = scmp.ne.s32.totalorder %s85, %s99
      %p101 = scmp.eq.s32.totalorder %s19, 0
      %p102 = por %p100, %p101
      %s103 = sadd.s32 %s20, %s21
      %s104 = sadd.s32 %s32, %s28
      %s105 = ssub.s32 %s103, %s104
      %p106 = scmp.eq.s32.totalorder %s105, 0
      %s108 = sadd.s32 %s107, 1
      %s109 = scalar_select %p106, %s107, %s108
      %p112 = pneg %p106
      %p113 = scmp.eq.s32.totalorder %s13, 1
      %p114 = por %p112, %p113
      %p115 = scmp.ne.s32.totalorder %s107, %s110
      %p116 = scmp.eq.s32.totalorder %s13, 0
      %p117 = por %p115, %p116
      %p118 = scmp.ne.s32.totalorder %s107, %s110
      %p119 = scmp.eq.s32.totalorder %s18, 1
      %p120 = por %p118, %p119
      %p121 = scmp.ne.s32.totalorder %s110, %s111
      %p122 = scmp.eq.s32.totalorder %s18, 0
      %p123 = por %p121, %p122
      %p124 = scmp.ne.s32.totalorder %s110, %s111
      %p125 = scmp.eq.s32.totalorder %s19, 1
      %p126 = por %p124, %p125
      %p128 = scmp.ne.s32.totalorder %s111, %s127
      %p129 = scmp.eq.s32.totalorder %s19, 0
      %p130 = por %p128, %p129
      %s131 = ssub.s32 %s20, %s32
      %p132 = scmp.eq.s32.totalorder %s131, 0
      %s134 = sadd.s32 %s133, 1
      %s135 = scalar_select %p132, %s133, %s134
      %p138 = pneg %p132
      %p139 = scmp.eq.s32.totalorder %s13, 1
      %p140 = por %p138, %p139
      %p141 = scmp.ne.s32.totalorder %s133, %s136
      %p142 = scmp.eq.s32.totalorder %s13, 0
      %p143 = por %p141, %p142
      %p144 = scmp.ne.s32.totalorder %s133, %s136
      %p145 = scmp.eq.s32.totalorder %s18, 1
      %p146 = por %p144, %p145
      %p147 = scmp.ne.s32.totalorder %s136, %s137
      %p148 = scmp.eq.s32.totalorder %s18, 0
      %p149 = por %p147, %p148
      %p150 = scmp.ne.s32.totalorder %s136, %s137
      %p151 = scmp.eq.s32.totalorder %s19, 1
      %p152 = por %p150, %p151
      %p154 = scmp.ne.s32.totalorder %s137, %s153
      %p155 = scmp.eq.s32.totalorder %s19, 0
      %p156 = por %p154, %p155
      %p157 = scmp.le.s32.totalorder 1, %s13
      %p158 = scmp.lt.s32.totalorder %s13, 3
      %p159 = pnand %p157, %p158
      %p160 = pneg %p159
      // Predicated region
      $region9: #{tpu_custom_call.1} parent=5 // pred_check
        _
      $region10: #{tpu_custom_call.1} parent=5 // pred_check_branch
        %162 = sbr.rel (%p159) target = $region12
      $region11: #{tpu_custom_call.1} parent=5 // pred_region
        %s163 = ssub.s32 %s13, 1
        // Predicated region
        $region13: #{tpu_custom_call.1} parent=11 // pred_check
          %p164 = pneg %p74
        $region14: #{tpu_custom_call.1} parent=11 // pred_check_branch
          %166 = sbr.rel (%p164) target = $region16
        $region15: #{tpu_custom_call.1} parent=11 // pred_region
          _
        $region16: #{tpu_custom_call.1} parent=11 // pred_fallthru
          _
        // Predicated region
        $region17: #{tpu_custom_call.1} parent=11 // pred_check
          %p167 = pneg %p95
        $region18: #{tpu_custom_call.1} parent=11 // pred_check_branch
          %169 = sbr.rel (%p167) target = $region20
        $region19: #{tpu_custom_call.1} parent=11 // pred_region
          _
        $region20: #{tpu_custom_call.1} parent=11 // pred_fallthru
          _
      $region12: #{tpu_custom_call.1} parent=5 // pred_fallthru
        _
      %p170 = scmp.lt.s32.totalorder %s13, 2
      // Predicated region
      $region21: #{tpu_custom_call.1} parent=5 // pred_check
        %p171 = pneg %p170
      $region22: #{tpu_custom_call.1} parent=5 // pred_check_branch
        %173 = sbr.rel (%p171) target = $region24
      $region23: #{tpu_custom_call.1} parent=5 // pred_region
        // Predicated region
        $region25: #{tpu_custom_call.1} parent=23 // pred_check
          %p174 = pneg %p47
        $region26: #{tpu_custom_call.1} parent=23 // pred_check_branch
          %176 = sbr.rel (%p174) target = $region28
        $region27: #{tpu_custom_call.1} parent=23 // pred_region
          %s177 = sadd.s32 %s20, %s21
          %s178 = smul.u32 32, %s177
          %p179 = scmp.lt.s32.totalorder %s178, 63
          %s180 = scalar_select %p179, %s178, 63
          %s181 = smul.addr %s180, 8
          %s182 = scalar_lea.vmem %s0, %s181
          %s183 = sadd.s32 %s20, %s21
          %s184 = smul.u32 32, %s183
        $region28: #{tpu_custom_call.1} parent=23 // pred_fallthru
          _
        // Predicated region
        $region29: #{tpu_custom_call.1} parent=23 // pred_check
          %p185 = pneg %p117
        $region30: #{tpu_custom_call.1} parent=23 // pred_check_branch
          %187 = sbr.rel (%p185) target = $region32
        $region31: #{tpu_custom_call.1} parent=23 // pred_region
          %s188 = sadd.s32 %s20, %s21
          %s189 = smul.u32 32, %s188
          %p190 = scmp.lt.s32.totalorder %s189, 63
          %s191 = scalar_select %p190, %s189, 63
          %s192 = smul.addr %s191, 8
          %s193 = scalar_lea.vmem %s3, %s192
          %s194 = sadd.s32 %s20, %s21
          %s195 = smul.u32 32, %s194
        $region32: #{tpu_custom_call.1} parent=23 // pred_fallthru
          _
      $region24: #{tpu_custom_call.1} parent=5 // pred_fallthru
        _
      %p196 = scmp.le.s32.totalorder 1, %s13
      %p197 = scmp.lt.s32.totalorder %s13, 3
      %p198 = pnand %p196, %p197
      %p199 = pneg %p198
      // Predicated region
      $region33: #{tpu_custom_call.1} parent=5 // pred_check
        _
      $region34: #{tpu_custom_call.1} parent=5 // pred_check_branch
        %201 = sbr.rel (%p198) target = $region36
      $region35: #{tpu_custom_call.1} parent=5 // pred_region
        %s202 = ssub.s32 %s13, 1
        %s203 = sadd.s32 %s22, %s23
        %s204 = smul.u32 32, %s203
        %p205 = scmp.lt.s32.totalorder %s204, 63
        %s206 = scalar_select %p205, %s204, 63
        %s207 = smul.addr %s206, 8
        %s208 = scalar_lea.vmem %s0, %s207
        %p209 = pneg %p53
        %p210 = pneg %p50
        %p211 = pneg %p74
        %p212 = pneg %p71
        %p213 = pneg %p95
        %p214 = pneg %p92
        %s215 = sadd.s32 %s22, %s23
        %s216 = smul.u32 32, %s215
        %p217 = scmp.lt.s32.totalorder %s216, 63
        %s218 = scalar_select %p217, %s216, 63
        %s219 = smul.addr %s218, 8
        %s220 = scalar_lea.vmem %s3, %s219
        %p221 = pneg %p123
        %p222 = pneg %p120
        %p223 = pneg %p149
        %p224 = pneg %p146
        %s225 = sand.u32 %s136, 1
        %s226 = scalar_lea.sflag [#allocation3], %s225
        %s227 = sand.u32 %s136, 1
        %s228 = scalar_lea.vmem [#allocation2], %s227
        %s229 = sadd.s32 %s22, %s23
        %s230 = smul.u32 32, %s229
        %p231 = scmp.lt.s32.totalorder %s230, 63
        %s232 = scalar_select %p231, %s230, 63
        %s233 = smul.addr %s232, 8
        %s234 = scalar_lea.vmem %s0, %s233
        %s235 = sadd.s32 %s22, %s23
        %s236 = smul.u32 32, %s235
        %s237 = sadd.s32 %s22, %s23
        %s238 = smul.u32 32, %s237
        %p239 = scmp.lt.s32.totalorder %s238, 63
        %s240 = scalar_select %p239, %s238, 63
        %s241 = smul.addr %s240, 8
        %s242 = scalar_lea.vmem %s3, %s241
        %s243 = sadd.s32 %s22, %s23
        %s244 = smul.u32 32, %s243
        %p245 = scmp.eq.s32.totalorder %s23, 0
        // Predicated region
        $region37: #{tpu_custom_call.1} parent=35 // pred_check
          %p246 = pneg %p245
        $region38: #{tpu_custom_call.1} parent=35 // pred_check_branch
          %248 = sbr.rel (%p246) target = $region40
        $region39: #{tpu_custom_call.1} parent=35 // pred_region
          %249 = vst [vmem:[%s228] sm:$0x1] -inf
        $region40: #{tpu_custom_call.1} parent=35 // pred_fallthru
          _
        %v250 = vld [vmem:[%s234] sm:$0xff]
        %v251 = vld [vmem:[%s234 + $0x8] sm:$0xff]
        %v252 = vld [vmem:[%s234 + $0x10] sm:$0xff]
        %v253 = vld [vmem:[%s234 + $0x18] sm:$0xff]
        %v254 = vld [vmem:[%s234 + $0x20] sm:$0xff]
        %v255 = vld [vmem:[%s234 + $0x28] sm:$0xff]
        %v256 = vld [vmem:[%s234 + $0x30] sm:$0xff]
        %v257 = vld [vmem:[%s234 + $0x38] sm:$0xff]
        %v258 = vld [vmem:[%s234 + $0x40] sm:$0xff]
        %v259 = vld [vmem:[%s234 + $0x48] sm:$0xff]
        %v260 = vld [vmem:[%s234 + $0x50] sm:$0xff]
        %v261 = vld [vmem:[%s234 + $0x58] sm:$0xff]
        %v262 = vld [vmem:[%s234 + $0x60] sm:$0xff]
        %v263 = vld [vmem:[%s234 + $0x68] sm:$0xff]
        %v264 = vld [vmem:[%s234 + $0x70] sm:$0xff]
        %v265 = vld [vmem:[%s234 + $0x78] sm:$0xff]
        %v266 = vld [vmem:[%s234 + $0x80] sm:$0xff]
        %v267 = vld [vmem:[%s234 + $0x88] sm:$0xff]
        %v268 = vld [vmem:[%s234 + $0x90] sm:$0xff]
        %v269 = vld [vmem:[%s234 + $0x98] sm:$0xff]
        %v270 = vld [vmem:[%s234 + $0xa0] sm:$0xff]
        %v271 = vld [vmem:[%s234 + $0xa8] sm:$0xff]
        %v272 = vld [vmem:[%s234 + $0xb0] sm:$0xff]
        %v273 = vld [vmem:[%s234 + $0xb8] sm:$0xff]
        %v274 = vld [vmem:[%s234 + $0xc0] sm:$0xff]
        %v275 = vld [vmem:[%s234 + $0xc8] sm:$0xff]
        %v276 = vld [vmem:[%s234 + $0xd0] sm:$0xff]
        %v277 = vld [vmem:[%s234 + $0xd8] sm:$0xff]
        %v278 = vld [vmem:[%s234 + $0xe0] sm:$0xff]
        %v279 = vld [vmem:[%s234 + $0xe8] sm:$0xff]
        %v280 = vld [vmem:[%s234 + $0xf0] sm:$0xff]
        %v281 = vld [vmem:[%s234 + $0xf8] sm:$0xff]
        %v282 = vmul.f32 %v250, %v250
        %v283 = vmul.f32 %v251, %v251
        %v284 = vmul.f32 %v252, %v252
        %v285 = vmul.f32 %v253, %v253
        %v286 = vmul.f32 %v254, %v254
        %v287 = vmul.f32 %v255, %v255
        %v288 = vmul.f32 %v256, %v256
        %v289 = vmul.f32 %v257, %v257
        %v290 = vmul.f32 %v258, %v258
        %v291 = vmul.f32 %v259, %v259
        %v292 = vmul.f32 %v260, %v260
        %v293 = vmul.f32 %v261, %v261
        %v294 = vmul.f32 %v262, %v262
        %v295 = vmul.f32 %v263, %v263
        %v296 = vmul.f32 %v264, %v264
        %v297 = vmul.f32 %v265, %v265
        %v298 = vmul.f32 %v266, %v266
        %v299 = vmul.f32 %v267, %v267
        %v300 = vmul.f32 %v268, %v268
        %v301 = vmul.f32 %v269, %v269
        %v302 = vmul.f32 %v270, %v270
        %v303 = vmul.f32 %v271, %v271
        %v304 = vmul.f32 %v272, %v272
        %v305 = vmul.f32 %v273, %v273
        %v306 = vmul.f32 %v274, %v274
        %v307 = vmul.f32 %v275, %v275
        %v308 = vmul.f32 %v276, %v276
        %v309 = vmul.f32 %v277, %v277
        %v310 = vmul.f32 %v278, %v278
        %v311 = vmul.f32 %v279, %v279
        %v312 = vmul.f32 %v280, %v280
        %v313 = vmul.f32 %v281, %v281
        %vm314 = vcmask 64512
        %v315 = vsel %vm314, %v282, 0.0
        %316 = vadd.xlane.f32.xlu0 %v315
        %v317 = vpop.xlane.xlu0 %316
        %v318 = vsel %vm314, %v283, 0.0
        %319 = vadd.xlane.f32.xlu0 %v318
        %v320 = vpop.xlane.xlu0 %319
        %v321 = vsel %vm314, %v284, 0.0
        %322 = vadd.xlane.f32.xlu0 %v321
        %v323 = vpop.xlane.xlu0 %322
        %v324 = vsel %vm314, %v285, 0.0
        %325 = vadd.xlane.f32.xlu0 %v324
        %v326 = vpop.xlane.xlu0 %325
        %v327 = vsel %vm314, %v286, 0.0
        %328 = vadd.xlane.f32.xlu0 %v327
        %v329 = vpop.xlane.xlu0 %328
        %v330 = vsel %vm314, %v287, 0.0
        %331 = vadd.xlane.f32.xlu0 %v330
        %v332 = vpop.xlane.xlu0 %331
        %v333 = vsel %vm314, %v288, 0.0
        %334 = vadd.xlane.f32.xlu0 %v333
        %v335 = vpop.xlane.xlu0 %334
        %v336 = vsel %vm314, %v289, 0.0
        %337 = vadd.xlane.f32.xlu0 %v336
        %v338 = vpop.xlane.xlu0 %337
        %v339 = vsel %vm314, %v290, 0.0
        %340 = vadd.xlane.f32.xlu0 %v339
        %v341 = vpop.xlane.xlu0 %340
        %v342 = vsel %vm314, %v291, 0.0
        %343 = vadd.xlane.f32.xlu0 %v342
        %v344 = vpop.xlane.xlu0 %343
        %v345 = vsel %vm314, %v292, 0.0
        %346 = vadd.xlane.f32.xlu0 %v345
        %v347 = vpop.xlane.xlu0 %346
        %v348 = vsel %vm314, %v293, 0.0
        %349 = vadd.xlane.f32.xlu0 %v348
        %v350 = vpop.xlane.xlu0 %349
        %v351 = vsel %vm314, %v294, 0.0
        %352 = vadd.xlane.f32.xlu0 %v351
        %v353 = vpop.xlane.xlu0 %352
        %v354 = vsel %vm314, %v295, 0.0
        %355 = vadd.xlane.f32.xlu0 %v354
        %v356 = vpop.xlane.xlu0 %355
        %v357 = vsel %vm314, %v296, 0.0
        %358 = vadd.xlane.f32.xlu0 %v357
        %v359 = vpop.xlane.xlu0 %358
        %v360 = vsel %vm314, %v297, 0.0
        %361 = vadd.xlane.f32.xlu0 %v360
        %v362 = vpop.xlane.xlu0 %361
        %v363 = vsel %vm314, %v298, 0.0
        %364 = vadd.xlane.f32.xlu0 %v363
        %v365 = vpop.xlane.xlu0 %364
        %v366 = vsel %vm314, %v299, 0.0
        %367 = vadd.xlane.f32.xlu0 %v366
        %v368 = vpop.xlane.xlu0 %367
        %v369 = vsel %vm314, %v300, 0.0
        %370 = vadd.xlane.f32.xlu0 %v369
        %v371 = vpop.xlane.xlu0 %370
        %v372 = vsel %vm314, %v301, 0.0
        %373 = vadd.xlane.f32.xlu0 %v372
        %v374 = vpop.xlane.xlu0 %373
        %v375 = vsel %vm314, %v302, 0.0
        %376 = vadd.xlane.f32.xlu0 %v375
        %v377 = vpop.xlane.xlu0 %376
        %v378 = vsel %vm314, %v303, 0.0
        %379 = vadd.xlane.f32.xlu0 %v378
        %v380 = vpop.xlane.xlu0 %379
        %v381 = vsel %vm314, %v304, 0.0
        %382 = vadd.xlane.f32.xlu0 %v381
        %v383 = vpop.xlane.xlu0 %382
        %v384 = vsel %vm314, %v305, 0.0
        %385 = vadd.xlane.f32.xlu0 %v384
        %v386 = vpop.xlane.xlu0 %385
        %v387 = vsel %vm314, %v306, 0.0
        %388 = vadd.xlane.f32.xlu0 %v387
        %v389 = vpop.xlane.xlu0 %388
        %v390 = vsel %vm314, %v307, 0.0
        %391 = vadd.xlane.f32.xlu0 %v390
        %v392 = vpop.xlane.xlu0 %391
        %v393 = vsel %vm314, %v308, 0.0
        %394 = vadd.xlane.f32.xlu0 %v393
        %v395 = vpop.xlane.xlu0 %394
        %v396 = vsel %vm314, %v309, 0.0
        %397 = vadd.xlane.f32.xlu0 %v396
        %v398 = vpop.xlane.xlu0 %397
        %v399 = vsel %vm314, %v310, 0.0
        %400 = vadd.xlane.f32.xlu0 %v399
        %v401 = vpop.xlane.xlu0 %400
        %v402 = vsel %vm314, %v311, 0.0
        %403 = vadd.xlane.f32.xlu0 %v402
        %v404 = vpop.xlane.xlu0 %403
        %v405 = vsel %vm314, %v312, 0.0
        %406 = vadd.xlane.f32.xlu0 %v405
        %v407 = vpop.xlane.xlu0 %406
        %v408 = vsel %vm314, %v313, 0.0
        %409 = vadd.xlane.f32.xlu0 %v408
        %v410 = vpop.xlane.xlu0 %409
        %v411 = vld [vmem:[%s1] sm:$0xff]
        %v413 = vsel %vm314, %v250, 0
        %v416 = vsel %vm314, %v251, 0
        %v419 = vsel %vm314, %v252, 0
        %v422 = vsel %vm314, %v253, 0
        %v425 = vsel %vm314, %v254, 0
        %v428 = vsel %vm314, %v255, 0
        %v431 = vsel %vm314, %v256, 0
        %v434 = vsel %vm314, %v257, 0
        %v437 = vsel %vm314, %v258, 0
        %v440 = vsel %vm314, %v259, 0
        %v443 = vsel %vm314, %v260, 0
        %v446 = vsel %vm314, %v261, 0
        %v449 = vsel %vm314, %v262, 0
        %v452 = vsel %vm314, %v263, 0
        %v455 = vsel %vm314, %v264, 0
        %v458 = vsel %vm314, %v265, 0
        %v461 = vsel %vm314, %v266, 0
        %v464 = vsel %vm314, %v267, 0
        %v467 = vsel %vm314, %v268, 0
        %v470 = vsel %vm314, %v269, 0
        %v473 = vsel %vm314, %v270, 0
        %v476 = vsel %vm314, %v271, 0
        %v479 = vsel %vm314, %v272, 0
        %v482 = vsel %vm314, %v273, 0
        %v485 = vsel %vm314, %v274, 0
        %v488 = vsel %vm314, %v275, 0
        %v491 = vsel %vm314, %v276, 0
        %v494 = vsel %vm314, %v277, 0
        %v497 = vsel %vm314, %v278, 0
        %v500 = vsel %vm314, %v279, 0
        %v503 = vsel %vm314, %v280, 0
        %v506 = vsel %vm314, %v281, 0
        %508 = vmatpush.msra.mxu0 0.0
        %509 = vmatpush.msra.mxu0 0.0
        %510 = vmatpush.msra.mxu0 0.0
        %511 = vmatpush.msra.mxu0 0.0
        %512 = vmatpush.msra.mxu0 0.0
        %513 = vmatpush.msra.mxu0 0.0
        %514 = vmatpush.msra.mxu0 0.0
        %515 = vmatpush.msra.mxu0 0.0
        %516 = vmatpush.msra.mxu0 0.0
        %517 = vmatpush.msra.mxu0 0.0
        %518 = vmatpush.msra.mxu0 0.0
        %519 = vmatpush.msra.mxu0 0.0
        %520 = vmatpush.msra.mxu0 0.0
        %521 = vmatpush.msra.mxu0 0.0
        %522 = vmatpush.msra.mxu0 0.0
        %v523 = vand.u32 %v411, 4294901760
        %524 = vmatpush.msra.mxu0 %v523
        %v525 = vand.u32 %v413, 4294901760
        %v526 = vsub.f32 %v413, %v525
        %v527 = vand.u32 %v526, 4294901760
        %v528 = vsub.f32 %v526, %v527
        %v529 = vand.u32 %v528, 4294901760
        %530 = vmatmul.f32.gmra.mxu0 %v529
        %v531 = vpop.f32.mrf.mxu0
        %v532 = vadd.f32 0.0, %v531
        %v533 = vand.u32 %v416, 4294901760
        %v534 = vsub.f32 %v416, %v533
        %v535 = vand.u32 %v534, 4294901760
        %v536 = vsub.f32 %v534, %v535
        %v537 = vand.u32 %v536, 4294901760
        %538 = vmatmul.f32.gmra.mxu0 %v537
        %v539 = vpop.f32.mrf.mxu0
        %v540 = vadd.f32 0.0, %v539
        %v541 = vand.u32 %v419, 4294901760
        %v542 = vsub.f32 %v419, %v541
        %v543 = vand.u32 %v542, 4294901760
        %v544 = vsub.f32 %v542, %v543
        %v545 = vand.u32 %v544, 4294901760
        %546 = vmatmul.f32.gmra.mxu0 %v545
        %v547 = vpop.f32.mrf.mxu0
        %v548 = vadd.f32 0.0, %v547
        %v549 = vand.u32 %v422, 4294901760
        %v550 = vsub.f32 %v422, %v549
        %v551 = vand.u32 %v550, 4294901760
        %v552 = vsub.f32 %v550, %v551
        %v553 = vand.u32 %v552, 4294901760
        %554 = vmatmul.f32.gmra.mxu0 %v553
        %v555 = vpop.f32.mrf.mxu0
        %v556 = vadd.f32 0.0, %v555
        %v557 = vand.u32 %v425, 4294901760
        %v558 = vsub.f32 %v425, %v557
        %v559 = vand.u32 %v558, 4294901760
        %v560 = vsub.f32 %v558, %v559
        %v561 = vand.u32 %v560, 4294901760
        %562 = vmatmul.f32.gmra.mxu0 %v561
        %v563 = vpop.f32.mrf.mxu0
        %v564 = vadd.f32 0.0, %v563
        %v565 = vand.u32 %v428, 4294901760
        %v566 = vsub.f32 %v428, %v565
        %v567 = vand.u32 %v566, 4294901760
        %v568 = vsub.f32 %v566, %v567
        %v569 = vand.u32 %v568, 4294901760
        %570 = vmatmul.f32.gmra.mxu0 %v569
        %v571 = vpop.f32.mrf.mxu0
        %v572 = vadd.f32 0.0, %v571
        %v573 = vand.u32 %v431, 4294901760
        %v574 = vsub.f32 %v431, %v573
        %v575 = vand.u32 %v574, 4294901760
        %v576 = vsub.f32 %v574, %v575
        %v577 = vand.u32 %v576, 4294901760
        %578 = vmatmul.f32.gmra.mxu0 %v577
        %v579 = vpop.f32.mrf.mxu0
        %v580 = vadd.f32 0.0, %v579
        %v581 = vand.u32 %v434, 4294901760
        %v582 = vsub.f32 %v434, %v581
        %v583 = vand.u32 %v582, 4294901760
        %v584 = vsub.f32 %v582, %v583
        %v585 = vand.u32 %v584, 4294901760
        %586 = vmatmul.f32.gmra.mxu0 %v585
        %v587 = vpop.f32.mrf.mxu0
        %v588 = vadd.f32 0.0, %v587
        %v589 = vand.u32 %v437, 4294901760
        %v590 = vsub.f32 %v437, %v589
        %v591 = vand.u32 %v590, 4294901760
        %v592 = vsub.f32 %v590, %v591
        %v593 = vand.u32 %v592, 4294901760
        %594 = vmatmul.f32.gmra.mxu0 %v593
        %v595 = vpop.f32.mrf.mxu0
        %v596 = vadd.f32 0.0, %v595
        %v597 = vand.u32 %v440, 4294901760
        %v598 = vsub.f32 %v440, %v597
        %v599 = vand.u32 %v598, 4294901760
        %v600 = vsub.f32 %v598, %v599
        %v601 = vand.u32 %v600, 4294901760
        %602 = vmatmul.f32.gmra.mxu0 %v601
        %v603 = vpop.f32.mrf.mxu0
        %v604 = vadd.f32 0.0, %v603
        %v605 = vand.u32 %v443, 4294901760
        %v606 = vsub.f32 %v443, %v605
        %v607 = vand.u32 %v606, 4294901760
        %v608 = vsub.f32 %v606, %v607
        %v609 = vand.u32 %v608, 4294901760
        %610 = vmatmul.f32.gmra.mxu0 %v609
        %v611 = vpop.f32.mrf.mxu0
        %v612 = vadd.f32 0.0, %v611
        %v613 = vand.u32 %v446, 4294901760
        %v614 = vsub.f32 %v446, %v613
        %v615 = vand.u32 %v614, 4294901760
        %v616 = vsub.f32 %v614, %v615
        %v617 = vand.u32 %v616, 4294901760
        %618 = vmatmul.f32.gmra.mxu0 %v617
        %v619 = vpop.f32.mrf.mxu0
        %v620 = vadd.f32 0.0, %v619
        %v621 = vand.u32 %v449, 4294901760
        %v622 = vsub.f32 %v449, %v621
        %v623 = vand.u32 %v622, 4294901760
        %v624 = vsub.f32 %v622, %v623
        %v625 = vand.u32 %v624, 4294901760
        %626 = vmatmul.f32.gmra.mxu0 %v625
        %v627 = vpop.f32.mrf.mxu0
        %v628 = vadd.f32 0.0, %v627
        %v629 = vand.u32 %v452, 4294901760
        %v630 = vsub.f32 %v452, %v629
        %v631 = vand.u32 %v630, 4294901760
        %v632 = vsub.f32 %v630, %v631
        %v633 = vand.u32 %v632, 4294901760
        %634 = vmatmul.f32.gmra.mxu0 %v633
        %v635 = vpop.f32.mrf.mxu0
        %v636 = vadd.f32 0.0, %v635
        %v637 = vand.u32 %v455, 4294901760
        %v638 = vsub.f32 %v455, %v637
        %v639 = vand.u32 %v638, 4294901760
        %v640 = vsub.f32 %v638, %v639
        %v641 = vand.u32 %v640, 4294901760
        %642 = vmatmul.f32.gmra.mxu0 %v641
        %v643 = vpop.f32.mrf.mxu0
        %v644 = vadd.f32 0.0, %v643
        %v645 = vand.u32 %v458, 4294901760
        %v646 = vsub.f32 %v458, %v645
        %v647 = vand.u32 %v646, 4294901760
        %v648 = vsub.f32 %v646, %v647
        %v649 = vand.u32 %v648, 4294901760
        %650 = vmatmul.f32.gmra.mxu0 %v649
        %v651 = vpop.f32.mrf.mxu0
        %v652 = vadd.f32 0.0, %v651
        %v653 = vand.u32 %v461, 4294901760
        %v654 = vsub.f32 %v461, %v653
        %v655 = vand.u32 %v654, 4294901760
        %v656 = vsub.f32 %v654, %v655
        %v657 = vand.u32 %v656, 4294901760
        %658 = vmatmul.f32.gmra.mxu0 %v657
        %v659 = vpop.f32.mrf.mxu0
        %v660 = vadd.f32 0.0, %v659
        %v661 = vand.u32 %v464, 4294901760
        %v662 = vsub.f32 %v464, %v661
        %v663 = vand.u32 %v662, 4294901760
        %v664 = vsub.f32 %v662, %v663
        %v665 = vand.u32 %v664, 4294901760
        %666 = vmatmul.f32.gmra.mxu0 %v665
        %v667 = vpop.f32.mrf.mxu0
        %v668 = vadd.f32 0.0, %v667
        %v669 = vand.u32 %v467, 4294901760
        %v670 = vsub.f32 %v467, %v669
        %v671 = vand.u32 %v670, 4294901760
        %v672 = vsub.f32 %v670, %v671
        %v673 = vand.u32 %v672, 4294901760
        %674 = vmatmul.f32.gmra.mxu0 %v673
        %v675 = vpop.f32.mrf.mxu0
        %v676 = vadd.f32 0.0, %v675
        %v677 = vand.u32 %v470, 4294901760
        %v678 = vsub.f32 %v470, %v677
        %v679 = vand.u32 %v678, 4294901760
        %v680 = vsub.f32 %v678, %v679
        %v681 = vand.u32 %v680, 4294901760
        %682 = vmatmul.f32.gmra.mxu0 %v681
        %v683 = vpop.f32.mrf.mxu0
        %v684 = vadd.f32 0.0, %v683
        %v685 = vand.u32 %v473, 4294901760
        %v686 = vsub.f32 %v473, %v685
        %v687 = vand.u32 %v686, 4294901760
        %v688 = vsub.f32 %v686, %v687
        %v689 = vand.u32 %v688, 4294901760
        %690 = vmatmul.f32.gmra.mxu0 %v689
        %v691 = vpop.f32.mrf.mxu0
        %v692 = vadd.f32 0.0, %v691
        %v693 = vand.u32 %v476, 4294901760
        %v694 = vsub.f32 %v476, %v693
        %v695 = vand.u32 %v694, 4294901760
        %v696 = vsub.f32 %v694, %v695
        %v697 = vand.u32 %v696, 4294901760
        %698 = vmatmul.f32.gmra.mxu0 %v697
        %v699 = vpop.f32.mrf.mxu0
        %v700 = vadd.f32 0.0, %v699
        %v701 = vand.u32 %v479, 4294901760
        %v702 = vsub.f32 %v479, %v701
        %v703 = vand.u32 %v702, 4294901760
        %v704 = vsub.f32 %v702, %v703
        %v705 = vand.u32 %v704, 4294901760
        %706 = vmatmul.f32.gmra.mxu0 %v705
        %v707 = vpop.f32.mrf.mxu0
        %v708 = vadd.f32 0.0, %v707
        %v709 = vand.u32 %v482, 4294901760
        %v710 = vsub.f32 %v482, %v709
        %v711 = vand.u32 %v710, 4294901760
        %v712 = vsub.f32 %v710, %v711
        %v713 = vand.u32 %v712, 4294901760
        %714 = vmatmul.f32.gmra.mxu0 %v713
        %v715 = vpop.f32.mrf.mxu0
        %v716 = vadd.f32 0.0, %v715
        %v717 = vand.u32 %v485, 4294901760
        %v718 = vsub.f32 %v485, %v717
        %v719 = vand.u32 %v718, 4294901760
        %v720 = vsub.f32 %v718, %v719
        %v721 = vand.u32 %v720, 4294901760
        %722 = vmatmul.f32.gmra.mxu0 %v721
        %v723 = vpop.f32.mrf.mxu0
        %v724 = vadd.f32 0.0, %v723
        %v725 = vand.u32 %v488, 4294901760
        %v726 = vsub.f32 %v488, %v725
        %v727 = vand.u32 %v726, 4294901760
        %v728 = vsub.f32 %v726, %v727
        %v729 = vand.u32 %v728, 4294901760
        %730 = vmatmul.f32.gmra.mxu0 %v729
        %v731 = vpop.f32.mrf.mxu0
        %v732 = vadd.f32 0.0, %v731
        %v733 = vand.u32 %v491, 4294901760
        %v734 = vsub.f32 %v491, %v733
        %v735 = vand.u32 %v734, 4294901760
        %v736 = vsub.f32 %v734, %v735
        %v737 = vand.u32 %v736, 4294901760
        %738 = vmatmul.f32.gmra.mxu0 %v737
        %v739 = vpop.f32.mrf.mxu0
        %v740 = vadd.f32 0.0, %v739
        %v741 = vand.u32 %v494, 4294901760
        %v742 = vsub.f32 %v494, %v741
        %v743 = vand.u32 %v742, 4294901760
        %v744 = vsub.f32 %v742, %v743
        %v745 = vand.u32 %v744, 4294901760
        %746 = vmatmul.f32.gmra.mxu0 %v745
        %v747 = vpop.f32.mrf.mxu0
        %v748 = vadd.f32 0.0, %v747
        %v749 = vand.u32 %v497, 4294901760
        %v750 = vsub.f32 %v497, %v749
        %v751 = vand.u32 %v750, 4294901760
        %v752 = vsub.f32 %v750, %v751
        %v753 = vand.u32 %v752, 4294901760
        %754 = vmatmul.f32.gmra.mxu0 %v753
        %v755 = vpop.f32.mrf.mxu0
        %v756 = vadd.f32 0.0, %v755
        %v757 = vand.u32 %v500, 4294901760
        %v758 = vsub.f32 %v500, %v757
        %v759 = vand.u32 %v758, 4294901760
        %v760 = vsub.f32 %v758, %v759
        %v761 = vand.u32 %v760, 4294901760
        %762 = vmatmul.f32.gmra.mxu0 %v761
        %v763 = vpop.f32.mrf.mxu0
        %v764 = vadd.f32 0.0, %v763
        %v765 = vand.u32 %v503, 4294901760
        %v766 = vsub.f32 %v503, %v765
        %v767 = vand.u32 %v766, 4294901760
        %v768 = vsub.f32 %v766, %v767
        %v769 = vand.u32 %v768, 4294901760
        %770 = vmatmul.f32.gmra.mxu0 %v769
        %v771 = vpop.f32.mrf.mxu0
        %v772 = vadd.f32 0.0, %v771
        %v773 = vand.u32 %v506, 4294901760
        %v774 = vsub.f32 %v506, %v773
        %v775 = vand.u32 %v774, 4294901760
        %v776 = vsub.f32 %v774, %v775
        %v777 = vand.u32 %v776, 4294901760
        %778 = vmatmul.f32.gmra.mxu0 %v777
        %v779 = vpop.f32.mrf.mxu0
        %v780 = vadd.f32 0.0, %v779
        %781 = vdwg.mxu0
        %782 = vmatpush.msra.mxu0 0.0
        %783 = vmatpush.msra.mxu0 0.0
        %784 = vmatpush.msra.mxu0 0.0
        %785 = vmatpush.msra.mxu0 0.0
        %786 = vmatpush.msra.mxu0 0.0
        %787 = vmatpush.msra.mxu0 0.0
        %788 = vmatpush.msra.mxu0 0.0
        %789 = vmatpush.msra.mxu0 0.0
        %790 = vmatpush.msra.mxu0 0.0
        %791 = vmatpush.msra.mxu0 0.0
        %792 = vmatpush.msra.mxu0 0.0
        %793 = vmatpush.msra.mxu0 0.0
        %794 = vmatpush.msra.mxu0 0.0
        %795 = vmatpush.msra.mxu0 0.0
        %796 = vmatpush.msra.mxu0 0.0
        %v797 = vand.u32 %v411, 4294901760
        %v798 = vsub.f32 %v411, %v797
        %v799 = vand.u32 %v798, 4294901760
        %v800 = vsub.f32 %v798, %v799
        %v801 = vand.u32 %v800, 4294901760
        %802 = vmatpush.msra.mxu0 %v801
        %v803 = vand.u32 %v413, 4294901760
        %804 = vmatmul.f32.gmra.mxu0 %v803
        %v805 = vpop.f32.mrf.mxu0
        %v806 = vadd.f32 %v532, %v805
        %v807 = vand.u32 %v416, 4294901760
        %808 = vmatmul.f32.gmra.mxu0 %v807
        %v809 = vpop.f32.mrf.mxu0
        %v810 = vadd.f32 %v540, %v809
        %v811 = vand.u32 %v419, 4294901760
        %812 = vmatmul.f32.gmra.mxu0 %v811
        %v813 = vpop.f32.mrf.mxu0
        %v814 = vadd.f32 %v548, %v813
        %v815 = vand.u32 %v422, 4294901760
        %816 = vmatmul.f32.gmra.mxu0 %v815
        %v817 = vpop.f32.mrf.mxu0
        %v818 = vadd.f32 %v556, %v817
        %v819 = vand.u32 %v425, 4294901760
        %820 = vmatmul.f32.gmra.mxu0 %v819
        %v821 = vpop.f32.mrf.mxu0
        %v822 = vadd.f32 %v564, %v821
        %v823 = vand.u32 %v428, 4294901760
        %824 = vmatmul.f32.gmra.mxu0 %v823
        %v825 = vpop.f32.mrf.mxu0
        %v826 = vadd.f32 %v572, %v825
        %v827 = vand.u32 %v431, 4294901760
        %828 = vmatmul.f32.gmra.mxu0 %v827
        %v829 = vpop.f32.mrf.mxu0
        %v830 = vadd.f32 %v580, %v829
        %v831 = vand.u32 %v434, 4294901760
        %832 = vmatmul.f32.gmra.mxu0 %v831
        %v833 = vpop.f32.mrf.mxu0
        %v834 = vadd.f32 %v588, %v833
        %v835 = vand.u32 %v437, 4294901760
        %836 = vmatmul.f32.gmra.mxu0 %v835
        %v837 = vpop.f32.mrf.mxu0
        %v838 = vadd.f32 %v596, %v837
        %v839 = vand.u32 %v440, 4294901760
        %840 = vmatmul.f32.gmra.mxu0 %v839
        %v841 = vpop.f32.mrf.mxu0
        %v842 = vadd.f32 %v604, %v841
        %v843 = vand.u32 %v443, 4294901760
        %844 = vmatmul.f32.gmra.mxu0 %v843
        %v845 = vpop.f32.mrf.mxu0
        %v846 = vadd.f32 %v612, %v845
        %v847 = vand.u32 %v446, 4294901760
        %848 = vmatmul.f32.gmra.mxu0 %v847
        %v849 = vpop.f32.mrf.mxu0
        %v850 = vadd.f32 %v620, %v849
        %v851 = vand.u32 %v449, 4294901760
        %852 = vmatmul.f32.gmra.mxu0 %v851
        %v853 = vpop.f32.mrf.mxu0
        %v854 = vadd.f32 %v628, %v853
        %v855 = vand.u32 %v452, 4294901760
        %856 = vmatmul.f32.gmra.mxu0 %v855
        %v857 = vpop.f32.mrf.mxu0
        %v858 = vadd.f32 %v636, %v857
        %v859 = vand.u32 %v455, 4294901760
        %860 = vmatmul.f32.gmra.mxu0 %v859
        %v861 = vpop.f32.mrf.mxu0
        %v862 = vadd.f32 %v644, %v861
        %v863 = vand.u32 %v458, 4294901760
        %864 = vmatmul.f32.gmra.mxu0 %v863
        %v865 = vpop.f32.mrf.mxu0
        %v866 = vadd.f32 %v652, %v865
        %v867 = vand.u32 %v461, 4294901760
        %868 = vmatmul.f32.gmra.mxu0 %v867
        %v869 = vpop.f32.mrf.mxu0
        %v870 = vadd.f32 %v660, %v869
        %v871 = vand.u32 %v464, 4294901760
        %872 = vmatmul.f32.gmra.mxu0 %v871
        %v873 = vpop.f32.mrf.mxu0
        %v874 = vadd.f32 %v668, %v873
        %v875 = vand.u32 %v467, 4294901760
        %876 = vmatmul.f32.gmra.mxu0 %v875
        %v877 = vpop.f32.mrf.mxu0
        %v878 = vadd.f32 %v676, %v877
        %v879 = vand.u32 %v470, 4294901760
        %880 = vmatmul.f32.gmra.mxu0 %v879
        %v881 = vpop.f32.mrf.mxu0
        %v882 = vadd.f32 %v684, %v881
        %v883 = vand.u32 %v473, 4294901760
        %884 = vmatmul.f32.gmra.mxu0 %v883
        %v885 = vpop.f32.mrf.mxu0
        %v886 = vadd.f32 %v692, %v885
        %v887 = vand.u32 %v476, 4294901760
        %888 = vmatmul.f32.gmra.mxu0 %v887
        %v889 = vpop.f32.mrf.mxu0
        %v890 = vadd.f32 %v700, %v889
        %v891 = vand.u32 %v479, 4294901760
        %892 = vmatmul.f32.gmra.mxu0 %v891
        %v893 = vpop.f32.mrf.mxu0
        %v894 = vadd.f32 %v708, %v893
        %v895 = vand.u32 %v482, 4294901760
        %896 = vmatmul.f32.gmra.mxu0 %v895
        %v897 = vpop.f32.mrf.mxu0
        %v898 = vadd.f32 %v716, %v897
        %v899 = vand.u32 %v485, 4294901760
        %900 = vmatmul.f32.gmra.mxu0 %v899
        %v901 = vpop.f32.mrf.mxu0
        %v902 = vadd.f32 %v724, %v901
        %v903 = vand.u32 %v488, 4294901760
        %904 = vmatmul.f32.gmra.mxu0 %v903
        %v905 = vpop.f32.mrf.mxu0
        %v906 = vadd.f32 %v732, %v905
        %v907 = vand.u32 %v491, 4294901760
        %908 = vmatmul.f32.gmra.mxu0 %v907
        %v909 = vpop.f32.mrf.mxu0
        %v910 = vadd.f32 %v740, %v909
        %v911 = vand.u32 %v494, 4294901760
        %912 = vmatmul.f32.gmra.mxu0 %v911
        %v913 = vpop.f32.mrf.mxu0
        %v914 = vadd.f32 %v748, %v913
        %v915 = vand.u32 %v497, 4294901760
        %916 = vmatmul.f32.gmra.mxu0 %v915
        %v917 = vpop.f32.mrf.mxu0
        %v918 = vadd.f32 %v756, %v917
        %v919 = vand.u32 %v500, 4294901760
        %920 = vmatmul.f32.gmra.mxu0 %v919
        %v921 = vpop.f32.mrf.mxu0
        %v922 = vadd.f32 %v764, %v921
        %v923 = vand.u32 %v503, 4294901760
        %924 = vmatmul.f32.gmra.mxu0 %v923
        %v925 = vpop.f32.mrf.mxu0
        %v926 = vadd.f32 %v772, %v925
        %v927 = vand.u32 %v506, 4294901760
        %928 = vmatmul.f32.gmra.mxu0 %v927
        %v929 = vpop.f32.mrf.mxu0
        %v930 = vadd.f32 %v780, %v929
        %931 = vdwg.mxu0
        %932 = vmatpush.msra.mxu0 0.0
        %933 = vmatpush.msra.mxu0 0.0
        %934 = vmatpush.msra.mxu0 0.0
        %935 = vmatpush.msra.mxu0 0.0
        %936 = vmatpush.msra.mxu0 0.0
        %937 = vmatpush.msra.mxu0 0.0
        %938 = vmatpush.msra.mxu0 0.0
        %939 = vmatpush.msra.mxu0 0.0
        %940 = vmatpush.msra.mxu0 0.0
        %941 = vmatpush.msra.mxu0 0.0
        %942 = vmatpush.msra.mxu0 0.0
        %943 = vmatpush.msra.mxu0 0.0
        %944 = vmatpush.msra.mxu0 0.0
        %945 = vmatpush.msra.mxu0 0.0
        %946 = vmatpush.msra.mxu0 0.0
        %v947 = vand.u32 %v411, 4294901760
        %v948 = vsub.f32 %v411, %v947
        %949 = vmatpush.msra.mxu0 %v948
        %v950 = vand.u32 %v413, 4294901760
        %v951 = vsub.f32 %v413, %v950
        %952 = vmatmul.f32.gmra.mxu0 %v951
        %v953 = vpop.f32.mrf.mxu0
        %v954 = vadd.f32 %v806, %v953
        %v955 = vand.u32 %v416, 4294901760
        %v956 = vsub.f32 %v416, %v955
        %957 = vmatmul.f32.gmra.mxu0 %v956
        %v958 = vpop.f32.mrf.mxu0
        %v959 = vadd.f32 %v810, %v958
        %v960 = vand.u32 %v419, 4294901760
        %v961 = vsub.f32 %v419, %v960
        %962 = vmatmul.f32.gmra.mxu0 %v961
        %v963 = vpop.f32.mrf.mxu0
        %v964 = vadd.f32 %v814, %v963
        %v965 = vand.u32 %v422, 4294901760
        %v966 = vsub.f32 %v422, %v965
        %967 = vmatmul.f32.gmra.mxu0 %v966
        %v968 = vpop.f32.mrf.mxu0
        %v969 = vadd.f32 %v818, %v968
        %v970 = vand.u32 %v425, 4294901760
        %v971 = vsub.f32 %v425, %v970
        %972 = vmatmul.f32.gmra.mxu0 %v971
        %v973 = vpop.f32.mrf.mxu0
        %v974 = vadd.f32 %v822, %v973
        %v975 = vand.u32 %v428, 4294901760
        %v976 = vsub.f32 %v428, %v975
        %977 = vmatmul.f32.gmra.mxu0 %v976
        %v978 = vpop.f32.mrf.mxu0
        %v979 = vadd.f32 %v826, %v978
        %v980 = vand.u32 %v431, 4294901760
        %v981 = vsub.f32 %v431, %v980
        %982 = vmatmul.f32.gmra.mxu0 %v981
        %v983 = vpop.f32.mrf.mxu0
        %v984 = vadd.f32 %v830, %v983
        %v985 = vand.u32 %v434, 4294901760
        %v986 = vsub.f32 %v434, %v985
        %987 = vmatmul.f32.gmra.mxu0 %v986
        %v988 = vpop.f32.mrf.mxu0
        %v989 = vadd.f32 %v834, %v988
        %v990 = vand.u32 %v437, 4294901760
        %v991 = vsub.f32 %v437, %v990
        %992 = vmatmul.f32.gmra.mxu0 %v991
        %v993 = vpop.f32.mrf.mxu0
        %v994 = vadd.f32 %v838, %v993
        %v995 = vand.u32 %v440, 4294901760
        %v996 = vsub.f32 %v440, %v995
        %997 = vmatmul.f32.gmra.mxu0 %v996
        %v998 = vpop.f32.mrf.mxu0
        %v999 = vadd.f32 %v842, %v998
        %v1000 = vand.u32 %v443, 4294901760
        %v1001 = vsub.f32 %v443, %v1000
        %1002 = vmatmul.f32.gmra.mxu0 %v1001
        %v1003 = vpop.f32.mrf.mxu0
        %v1004 = vadd.f32 %v846, %v1003
        %v1005 = vand.u32 %v446, 4294901760
        %v1006 = vsub.f32 %v446, %v1005
        %1007 = vmatmul.f32.gmra.mxu0 %v1006
        %v1008 = vpop.f32.mrf.mxu0
        %v1009 = vadd.f32 %v850, %v1008
        %v1010 = vand.u32 %v449, 4294901760
        %v1011 = vsub.f32 %v449, %v1010
        %1012 = vmatmul.f32.gmra.mxu0 %v1011
        %v1013 = vpop.f32.mrf.mxu0
        %v1014 = vadd.f32 %v854, %v1013
        %v1015 = vand.u32 %v452, 4294901760
        %v1016 = vsub.f32 %v452, %v1015
        %1017 = vmatmul.f32.gmra.mxu0 %v1016
        %v1018 = vpop.f32.mrf.mxu0
        %v1019 = vadd.f32 %v858, %v1018
        %v1020 = vand.u32 %v455, 4294901760
        %v1021 = vsub.f32 %v455, %v1020
        %1022 = vmatmul.f32.gmra.mxu0 %v1021
        %v1023 = vpop.f32.mrf.mxu0
        %v1024 = vadd.f32 %v862, %v1023
        %v1025 = vand.u32 %v458, 4294901760
        %v1026 = vsub.f32 %v458, %v1025
        %1027 = vmatmul.f32.gmra.mxu0 %v1026
        %v1028 = vpop.f32.mrf.mxu0
        %v1029 = vadd.f32 %v866, %v1028
        %v1030 = vand.u32 %v461, 4294901760
        %v1031 = vsub.f32 %v461, %v1030
        %1032 = vmatmul.f32.gmra.mxu0 %v1031
        %v1033 = vpop.f32.mrf.mxu0
        %v1034 = vadd.f32 %v870, %v1033
        %v1035 = vand.u32 %v464, 4294901760
        %v1036 = vsub.f32 %v464, %v1035
        %1037 = vmatmul.f32.gmra.mxu0 %v1036
        %v1038 = vpop.f32.mrf.mxu0
        %v1039 = vadd.f32 %v874, %v1038
        %v1040 = vand.u32 %v467, 4294901760
        %v1041 = vsub.f32 %v467, %v1040
        %1042 = vmatmul.f32.gmra.mxu0 %v1041
        %v1043 = vpop.f32.mrf.mxu0
        %v1044 = vadd.f32 %v878, %v1043
        %v1045 = vand.u32 %v470, 4294901760
        %v1046 = vsub.f32 %v470, %v1045
        %1047 = vmatmul.f32.gmra.mxu0 %v1046
        %v1048 = vpop.f32.mrf.mxu0
        %v1049 = vadd.f32 %v882, %v1048
        %v1050 = vand.u32 %v473, 4294901760
        %v1051 = vsub.f32 %v473, %v1050
        %1052 = vmatmul.f32.gmra.mxu0 %v1051
        %v1053 = vpop.f32.mrf.mxu0
        %v1054 = vadd.f32 %v886, %v1053
        %v1055 = vand.u32 %v476, 4294901760
        %v1056 = vsub.f32 %v476, %v1055
        %1057 = vmatmul.f32.gmra.mxu0 %v1056
        %v1058 = vpop.f32.mrf.mxu0
        %v1059 = vadd.f32 %v890, %v1058
        %v1060 = vand.u32 %v479, 4294901760
        %v1061 = vsub.f32 %v479, %v1060
        %1062 = vmatmul.f32.gmra.mxu0 %v1061
        %v1063 = vpop.f32.mrf.mxu0
        %v1064 = vadd.f32 %v894, %v1063
        %v1065 = vand.u32 %v482, 4294901760
        %v1066 = vsub.f32 %v482, %v1065
        %1067 = vmatmul.f32.gmra.mxu0 %v1066
        %v1068 = vpop.f32.mrf.mxu0
        %v1069 = vadd.f32 %v898, %v1068
        %v1070 = vand.u32 %v485, 4294901760
        %v1071 = vsub.f32 %v485, %v1070
        %1072 = vmatmul.f32.gmra.mxu0 %v1071
        %v1073 = vpop.f32.mrf.mxu0
        %v1074 = vadd.f32 %v902, %v1073
        %v1075 = vand.u32 %v488, 4294901760
        %v1076 = vsub.f32 %v488, %v1075
        %1077 = vmatmul.f32.gmra.mxu0 %v1076
        %v1078 = vpop.f32.mrf.mxu0
        %v1079 = vadd.f32 %v906, %v1078
        %v1080 = vand.u32 %v491, 4294901760
        %v1081 = vsub.f32 %v491, %v1080
        %1082 = vmatmul.f32.gmra.mxu0 %v1081
        %v1083 = vpop.f32.mrf.mxu0
        %v1084 = vadd.f32 %v910, %v1083
        %v1085 = vand.u32 %v494, 4294901760
        %v1086 = vsub.f32 %v494, %v1085
        %1087 = vmatmul.f32.gmra.mxu0 %v1086
        %v1088 = vpop.f32.mrf.mxu0
        %v1089 = vadd.f32 %v914, %v1088
        %v1090 = vand.u32 %v497, 4294901760
        %v1091 = vsub.f32 %v497, %v1090
        %1092 = vmatmul.f32.gmra.mxu0 %v1091
        %v1093 = vpop.f32.mrf.mxu0
        %v1094 = vadd.f32 %v918, %v1093
        %v1095 = vand.u32 %v500, 4294901760
        %v1096 = vsub.f32 %v500, %v1095
        %1097 = vmatmul.f32.gmra.mxu0 %v1096
        %v1098 = vpop.f32.mrf.mxu0
        %v1099 = vadd.f32 %v922, %v1098
        %v1100 = vand.u32 %v503, 4294901760
        %v1101 = vsub.f32 %v503, %v1100
        %1102 = vmatmul.f32.gmra.mxu0 %v1101
        %v1103 = vpop.f32.mrf.mxu0
        %v1104 = vadd.f32 %v926, %v1103
        %v1105 = vand.u32 %v506, 4294901760
        %v1106 = vsub.f32 %v506, %v1105
        %1107 = vmatmul.f32.gmra.mxu0 %v1106
        %v1108 = vpop.f32.mrf.mxu0
        %v1109 = vadd.f32 %v930, %v1108
        %1110 = vdwg.mxu0
        %1111 = vmatpush.msra.mxu0 0.0
        %1112 = vmatpush.msra.mxu0 0.0
        %1113 = vmatpush.msra.mxu0 0.0
        %1114 = vmatpush.msra.mxu0 0.0
        %1115 = vmatpush.msra.mxu0 0.0
        %1116 = vmatpush.msra.mxu0 0.0
        %1117 = vmatpush.msra.mxu0 0.0
        %1118 = vmatpush.msra.mxu0 0.0
        %1119 = vmatpush.msra.mxu0 0.0
        %1120 = vmatpush.msra.mxu0 0.0
        %1121 = vmatpush.msra.mxu0 0.0
        %1122 = vmatpush.msra.mxu0 0.0
        %1123 = vmatpush.msra.mxu0 0.0
        %1124 = vmatpush.msra.mxu0 0.0
        %1125 = vmatpush.msra.mxu0 0.0
        %v1126 = vand.u32 %v411, 4294901760
        %1127 = vmatpush.msra.mxu0 %v1126
        %v1128 = vand.u32 %v413, 4294901760
        %v1129 = vsub.f32 %v413, %v1128
        %v1130 = vand.u32 %v1129, 4294901760
        %1131 = vmatmul.f32.gmra.mxu0 %v1130
        %v1132 = vpop.f32.mrf.mxu0
        %v1133 = vadd.f32 %v954, %v1132
        %v1134 = vand.u32 %v416, 4294901760
        %v1135 = vsub.f32 %v416, %v1134
        %v1136 = vand.u32 %v1135, 4294901760
        %1137 = vmatmul.f32.gmra.mxu0 %v1136
        %v1138 = vpop.f32.mrf.mxu0
        %v1139 = vadd.f32 %v959, %v1138
        %v1140 = vand.u32 %v419, 4294901760
        %v1141 = vsub.f32 %v419, %v1140
        %v1142 = vand.u32 %v1141, 4294901760
        %1143 = vmatmul.f32.gmra.mxu0 %v1142
        %v1144 = vpop.f32.mrf.mxu0
        %v1145 = vadd.f32 %v964, %v1144
        %v1146 = vand.u32 %v422, 4294901760
        %v1147 = vsub.f32 %v422, %v1146
        %v1148 = vand.u32 %v1147, 4294901760
        %1149 = vmatmul.f32.gmra.mxu0 %v1148
        %v1150 = vpop.f32.mrf.mxu0
        %v1151 = vadd.f32 %v969, %v1150
        %v1152 = vand.u32 %v425, 4294901760
        %v1153 = vsub.f32 %v425, %v1152
        %v1154 = vand.u32 %v1153, 4294901760
        %1155 = vmatmul.f32.gmra.mxu0 %v1154
        %v1156 = vpop.f32.mrf.mxu0
        %v1157 = vadd.f32 %v974, %v1156
        %v1158 = vand.u32 %v428, 4294901760
        %v1159 = vsub.f32 %v428, %v1158
        %v1160 = vand.u32 %v1159, 4294901760
        %1161 = vmatmul.f32.gmra.mxu0 %v1160
        %v1162 = vpop.f32.mrf.mxu0
        %v1163 = vadd.f32 %v979, %v1162
        %v1164 = vand.u32 %v431, 4294901760
        %v1165 = vsub.f32 %v431, %v1164
        %v1166 = vand.u32 %v1165, 4294901760
        %1167 = vmatmul.f32.gmra.mxu0 %v1166
        %v1168 = vpop.f32.mrf.mxu0
        %v1169 = vadd.f32 %v984, %v1168
        %v1170 = vand.u32 %v434, 4294901760
        %v1171 = vsub.f32 %v434, %v1170
        %v1172 = vand.u32 %v1171, 4294901760
        %1173 = vmatmul.f32.gmra.mxu0 %v1172
        %v1174 = vpop.f32.mrf.mxu0
        %v1175 = vadd.f32 %v989, %v1174
        %v1176 = vand.u32 %v437, 4294901760
        %v1177 = vsub.f32 %v437, %v1176
        %v1178 = vand.u32 %v1177, 4294901760
        %1179 = vmatmul.f32.gmra.mxu0 %v1178
        %v1180 = vpop.f32.mrf.mxu0
        %v1181 = vadd.f32 %v994, %v1180
        %v1182 = vand.u32 %v440, 4294901760
        %v1183 = vsub.f32 %v440, %v1182
        %v1184 = vand.u32 %v1183, 4294901760
        %1185 = vmatmul.f32.gmra.mxu0 %v1184
        %v1186 = vpop.f32.mrf.mxu0
        %v1187 = vadd.f32 %v999, %v1186
        %v1188 = vand.u32 %v443, 4294901760
        %v1189 = vsub.f32 %v443, %v1188
        %v1190 = vand.u32 %v1189, 4294901760
        %1191 = vmatmul.f32.gmra.mxu0 %v1190
        %v1192 = vpop.f32.mrf.mxu0
        %v1193 = vadd.f32 %v1004, %v1192
        %v1194 = vand.u32 %v446, 4294901760
        %v1195 = vsub.f32 %v446, %v1194
        %v1196 = vand.u32 %v1195, 4294901760
        %1197 = vmatmul.f32.gmra.mxu0 %v1196
        %v1198 = vpop.f32.mrf.mxu0
        %v1199 = vadd.f32 %v1009, %v1198
        %v1200 = vand.u32 %v449, 4294901760
        %v1201 = vsub.f32 %v449, %v1200
        %v1202 = vand.u32 %v1201, 4294901760
        %1203 = vmatmul.f32.gmra.mxu0 %v1202
        %v1204 = vpop.f32.mrf.mxu0
        %v1205 = vadd.f32 %v1014, %v1204
        %v1206 = vand.u32 %v452, 4294901760
        %v1207 = vsub.f32 %v452, %v1206
        %v1208 = vand.u32 %v1207, 4294901760
        %1209 = vmatmul.f32.gmra.mxu0 %v1208
        %v1210 = vpop.f32.mrf.mxu0
        %v1211 = vadd.f32 %v1019, %v1210
        %v1212 = vand.u32 %v455, 4294901760
        %v1213 = vsub.f32 %v455, %v1212
        %v1214 = vand.u32 %v1213, 4294901760
        %1215 = vmatmul.f32.gmra.mxu0 %v1214
        %v1216 = vpop.f32.mrf.mxu0
        %v1217 = vadd.f32 %v1024, %v1216
        %v1218 = vand.u32 %v458, 4294901760
        %v1219 = vsub.f32 %v458, %v1218
        %v1220 = vand.u32 %v1219, 4294901760
        %1221 = vmatmul.f32.gmra.mxu0 %v1220
        %v1222 = vpop.f32.mrf.mxu0
        %v1223 = vadd.f32 %v1029, %v1222
        %v1224 = vand.u32 %v461, 4294901760
        %v1225 = vsub.f32 %v461, %v1224
        %v1226 = vand.u32 %v1225, 4294901760
        %1227 = vmatmul.f32.gmra.mxu0 %v1226
        %v1228 = vpop.f32.mrf.mxu0
        %v1229 = vadd.f32 %v1034, %v1228
        %v1230 = vand.u32 %v464, 4294901760
        %v1231 = vsub.f32 %v464, %v1230
        %v1232 = vand.u32 %v1231, 4294901760
        %1233 = vmatmul.f32.gmra.mxu0 %v1232
        %v1234 = vpop.f32.mrf.mxu0
        %v1235 = vadd.f32 %v1039, %v1234
        %v1236 = vand.u32 %v467, 4294901760
        %v1237 = vsub.f32 %v467, %v1236
        %v1238 = vand.u32 %v1237, 4294901760
        %1239 = vmatmul.f32.gmra.mxu0 %v1238
        %v1240 = vpop.f32.mrf.mxu0
        %v1241 = vadd.f32 %v1044, %v1240
        %v1242 = vand.u32 %v470, 4294901760
        %v1243 = vsub.f32 %v470, %v1242
        %v1244 = vand.u32 %v1243, 4294901760
        %1245 = vmatmul.f32.gmra.mxu0 %v1244
        %v1246 = vpop.f32.mrf.mxu0
        %v1247 = vadd.f32 %v1049, %v1246
        %v1248 = vand.u32 %v473, 4294901760
        %v1249 = vsub.f32 %v473, %v1248
        %v1250 = vand.u32 %v1249, 4294901760
        %1251 = vmatmul.f32.gmra.mxu0 %v1250
        %v1252 = vpop.f32.mrf.mxu0
        %v1253 = vadd.f32 %v1054, %v1252
        %v1254 = vand.u32 %v476, 4294901760
        %v1255 = vsub.f32 %v476, %v1254
        %v1256 = vand.u32 %v1255, 4294901760
        %1257 = vmatmul.f32.gmra.mxu0 %v1256
        %v1258 = vpop.f32.mrf.mxu0
        %v1259 = vadd.f32 %v1059, %v1258
        %v1260 = vand.u32 %v479, 4294901760
        %v1261 = vsub.f32 %v479, %v1260
        %v1262 = vand.u32 %v1261, 4294901760
        %1263 = vmatmul.f32.gmra.mxu0 %v1262
        %v1264 = vpop.f32.mrf.mxu0
        %v1265 = vadd.f32 %v1064, %v1264
        %v1266 = vand.u32 %v482, 4294901760
        %v1267 = vsub.f32 %v482, %v1266
        %v1268 = vand.u32 %v1267, 4294901760
        %1269 = vmatmul.f32.gmra.mxu0 %v1268
        %v1270 = vpop.f32.mrf.mxu0
        %v1271 = vadd.f32 %v1069, %v1270
        %v1272 = vand.u32 %v485, 4294901760
        %v1273 = vsub.f32 %v485, %v1272
        %v1274 = vand.u32 %v1273, 4294901760
        %1275 = vmatmul.f32.gmra.mxu0 %v1274
        %v1276 = vpop.f32.mrf.mxu0
        %v1277 = vadd.f32 %v1074, %v1276
        %v1278 = vand.u32 %v488, 4294901760
        %v1279 = vsub.f32 %v488, %v1278
        %v1280 = vand.u32 %v1279, 4294901760
        %1281 = vmatmul.f32.gmra.mxu0 %v1280
        %v1282 = vpop.f32.mrf.mxu0
        %v1283 = vadd.f32 %v1079, %v1282
        %v1284 = vand.u32 %v491, 4294901760
        %v1285 = vsub.f32 %v491, %v1284
        %v1286 = vand.u32 %v1285, 4294901760
        %1287 = vmatmul.f32.gmra.mxu0 %v1286
        %v1288 = vpop.f32.mrf.mxu0
        %v1289 = vadd.f32 %v1084, %v1288
        %v1290 = vand.u32 %v494, 4294901760
        %v1291 = vsub.f32 %v494, %v1290
        %v1292 = vand.u32 %v1291, 4294901760
        %1293 = vmatmul.f32.gmra.mxu0 %v1292
        %v1294 = vpop.f32.mrf.mxu0
        %v1295 = vadd.f32 %v1089, %v1294
        %v1296 = vand.u32 %v497, 4294901760
        %v1297 = vsub.f32 %v497, %v1296
        %v1298 = vand.u32 %v1297, 4294901760
        %1299 = vmatmul.f32.gmra.mxu0 %v1298
        %v1300 = vpop.f32.mrf.mxu0
        %v1301 = vadd.f32 %v1094, %v1300
        %v1302 = vand.u32 %v500, 4294901760
        %v1303 = vsub.f32 %v500, %v1302
        %v1304 = vand.u32 %v1303, 4294901760
        %1305 = vmatmul.f32.gmra.mxu0 %v1304
        %v1306 = vpop.f32.mrf.mxu0
        %v1307 = vadd.f32 %v1099, %v1306
        %v1308 = vand.u32 %v503, 4294901760
        %v1309 = vsub.f32 %v503, %v1308
        %v1310 = vand.u32 %v1309, 4294901760
        %1311 = vmatmul.f32.gmra.mxu0 %v1310
        %v1312 = vpop.f32.mrf.mxu0
        %v1313 = vadd.f32 %v1104, %v1312
        %v1314 = vand.u32 %v506, 4294901760
        %v1315 = vsub.f32 %v506, %v1314
        %v1316 = vand.u32 %v1315, 4294901760
        %1317 = vmatmul.f32.gmra.mxu0 %v1316
        %v1318 = vpop.f32.mrf.mxu0
        %v1319 = vadd.f32 %v1109, %v1318
        %1320 = vdwg.mxu0
        %1321 = vmatpush.msra.mxu0 0.0
        %1322 = vmatpush.msra.mxu0 0.0
        %1323 = vmatpush.msra.mxu0 0.0
        %1324 = vmatpush.msra.mxu0 0.0
        %1325 = vmatpush.msra.mxu0 0.0
        %1326 = vmatpush.msra.mxu0 0.0
        %1327 = vmatpush.msra.mxu0 0.0
        %1328 = vmatpush.msra.mxu0 0.0
        %1329 = vmatpush.msra.mxu0 0.0
        %1330 = vmatpush.msra.mxu0 0.0
        %1331 = vmatpush.msra.mxu0 0.0
        %1332 = vmatpush.msra.mxu0 0.0
        %1333 = vmatpush.msra.mxu0 0.0
        %1334 = vmatpush.msra.mxu0 0.0
        %1335 = vmatpush.msra.mxu0 0.0
        %v1336 = vand.u32 %v411, 4294901760
        %v1337 = vsub.f32 %v411, %v1336
        %v1338 = vand.u32 %v1337, 4294901760
        %1339 = vmatpush.msra.mxu0 %v1338
        %v1340 = vand.u32 %v413, 4294901760
        %1341 = vmatmul.f32.gmra.mxu0 %v1340
        %v1342 = vpop.f32.mrf.mxu0
        %v1343 = vadd.f32 %v1133, %v1342
        %v1344 = vand.u32 %v416, 4294901760
        %1345 = vmatmul.f32.gmra.mxu0 %v1344
        %v1346 = vpop.f32.mrf.mxu0
        %v1347 = vadd.f32 %v1139, %v1346
        %v1348 = vand.u32 %v419, 4294901760
        %1349 = vmatmul.f32.gmra.mxu0 %v1348
        %v1350 = vpop.f32.mrf.mxu0
        %v1351 = vadd.f32 %v1145, %v1350
        %v1352 = vand.u32 %v422, 4294901760
        %1353 = vmatmul.f32.gmra.mxu0 %v1352
        %v1354 = vpop.f32.mrf.mxu0
        %v1355 = vadd.f32 %v1151, %v1354
        %v1356 = vand.u32 %v425, 4294901760
        %1357 = vmatmul.f32.gmra.mxu0 %v1356
        %v1358 = vpop.f32.mrf.mxu0
        %v1359 = vadd.f32 %v1157, %v1358
        %v1360 = vand.u32 %v428, 4294901760
        %1361 = vmatmul.f32.gmra.mxu0 %v1360
        %v1362 = vpop.f32.mrf.mxu0
        %v1363 = vadd.f32 %v1163, %v1362
        %v1364 = vand.u32 %v431, 4294901760
        %1365 = vmatmul.f32.gmra.mxu0 %v1364
        %v1366 = vpop.f32.mrf.mxu0
        %v1367 = vadd.f32 %v1169, %v1366
        %v1368 = vand.u32 %v434, 4294901760
        %1369 = vmatmul.f32.gmra.mxu0 %v1368
        %v1370 = vpop.f32.mrf.mxu0
        %v1371 = vadd.f32 %v1175, %v1370
        %v1372 = vand.u32 %v437, 4294901760
        %1373 = vmatmul.f32.gmra.mxu0 %v1372
        %v1374 = vpop.f32.mrf.mxu0
        %v1375 = vadd.f32 %v1181, %v1374
        %v1376 = vand.u32 %v440, 4294901760
        %1377 = vmatmul.f32.gmra.mxu0 %v1376
        %v1378 = vpop.f32.mrf.mxu0
        %v1379 = vadd.f32 %v1187, %v1378
        %v1380 = vand.u32 %v443, 4294901760
        %1381 = vmatmul.f32.gmra.mxu0 %v1380
        %v1382 = vpop.f32.mrf.mxu0
        %v1383 = vadd.f32 %v1193, %v1382
        %v1384 = vand.u32 %v446, 4294901760
        %1385 = vmatmul.f32.gmra.mxu0 %v1384
        %v1386 = vpop.f32.mrf.mxu0
        %v1387 = vadd.f32 %v1199, %v1386
        %v1388 = vand.u32 %v449, 4294901760
        %1389 = vmatmul.f32.gmra.mxu0 %v1388
        %v1390 = vpop.f32.mrf.mxu0
        %v1391 = vadd.f32 %v1205, %v1390
        %v1392 = vand.u32 %v452, 4294901760
        %1393 = vmatmul.f32.gmra.mxu0 %v1392
        %v1394 = vpop.f32.mrf.mxu0
        %v1395 = vadd.f32 %v1211, %v1394
        %v1396 = vand.u32 %v455, 4294901760
        %1397 = vmatmul.f32.gmra.mxu0 %v1396
        %v1398 = vpop.f32.mrf.mxu0
        %v1399 = vadd.f32 %v1217, %v1398
        %v1400 = vand.u32 %v458, 4294901760
        %1401 = vmatmul.f32.gmra.mxu0 %v1400
        %v1402 = vpop.f32.mrf.mxu0
        %v1403 = vadd.f32 %v1223, %v1402
        %v1404 = vand.u32 %v461, 4294901760
        %1405 = vmatmul.f32.gmra.mxu0 %v1404
        %v1406 = vpop.f32.mrf.mxu0
        %v1407 = vadd.f32 %v1229, %v1406
        %v1408 = vand.u32 %v464, 4294901760
        %1409 = vmatmul.f32.gmra.mxu0 %v1408
        %v1410 = vpop.f32.mrf.mxu0
        %v1411 = vadd.f32 %v1235, %v1410
        %v1412 = vand.u32 %v467, 4294901760
        %1413 = vmatmul.f32.gmra.mxu0 %v1412
        %v1414 = vpop.f32.mrf.mxu0
        %v1415 = vadd.f32 %v1241, %v1414
        %v1416 = vand.u32 %v470, 4294901760
        %1417 = vmatmul.f32.gmra.mxu0 %v1416
        %v1418 = vpop.f32.mrf.mxu0
        %v1419 = vadd.f32 %v1247, %v1418
        %v1420 = vand.u32 %v473, 4294901760
        %1421 = vmatmul.f32.gmra.mxu0 %v1420
        %v1422 = vpop.f32.mrf.mxu0
        %v1423 = vadd.f32 %v1253, %v1422
        %v1424 = vand.u32 %v476, 4294901760
        %1425 = vmatmul.f32.gmra.mxu0 %v1424
        %v1426 = vpop.f32.mrf.mxu0
        %v1427 = vadd.f32 %v1259, %v1426
        %v1428 = vand.u32 %v479, 4294901760
        %1429 = vmatmul.f32.gmra.mxu0 %v1428
        %v1430 = vpop.f32.mrf.mxu0
        %v1431 = vadd.f32 %v1265, %v1430
        %v1432 = vand.u32 %v482, 4294901760
        %1433 = vmatmul.f32.gmra.mxu0 %v1432
        %v1434 = vpop.f32.mrf.mxu0
        %v1435 = vadd.f32 %v1271, %v1434
        %v1436 = vand.u32 %v485, 4294901760
        %1437 = vmatmul.f32.gmra.mxu0 %v1436
        %v1438 = vpop.f32.mrf.mxu0
        %v1439 = vadd.f32 %v1277, %v1438
        %v1440 = vand.u32 %v488, 4294901760
        %1441 = vmatmul.f32.gmra.mxu0 %v1440
        %v1442 = vpop.f32.mrf.mxu0
        %v1443 = vadd.f32 %v1283, %v1442
        %v1444 = vand.u32 %v491, 4294901760
        %1445 = vmatmul.f32.gmra.mxu0 %v1444
        %v1446 = vpop.f32.mrf.mxu0
        %v1447 = vadd.f32 %v1289, %v1446
        %v1448 = vand.u32 %v494, 4294901760
        %1449 = vmatmul.f32.gmra.mxu0 %v1448
        %v1450 = vpop.f32.mrf.mxu0
        %v1451 = vadd.f32 %v1295, %v1450
        %v1452 = vand.u32 %v497, 4294901760
        %1453 = vmatmul.f32.gmra.mxu0 %v1452
        %v1454 = vpop.f32.mrf.mxu0
        %v1455 = vadd.f32 %v1301, %v1454
        %v1456 = vand.u32 %v500, 4294901760
        %1457 = vmatmul.f32.gmra.mxu0 %v1456
        %v1458 = vpop.f32.mrf.mxu0
        %v1459 = vadd.f32 %v1307, %v1458
        %v1460 = vand.u32 %v503, 4294901760
        %1461 = vmatmul.f32.gmra.mxu0 %v1460
        %v1462 = vpop.f32.mrf.mxu0
        %v1463 = vadd.f32 %v1313, %v1462
        %v1464 = vand.u32 %v506, 4294901760
        %1465 = vmatmul.f32.gmra.mxu0 %v1464
        %v1466 = vpop.f32.mrf.mxu0
        %v1467 = vadd.f32 %v1319, %v1466
        %1468 = vdwg.mxu0
        %1469 = vmatpush.msra.mxu0 0.0
        %1470 = vmatpush.msra.mxu0 0.0
        %1471 = vmatpush.msra.mxu0 0.0
        %1472 = vmatpush.msra.mxu0 0.0
        %1473 = vmatpush.msra.mxu0 0.0
        %1474 = vmatpush.msra.mxu0 0.0
        %1475 = vmatpush.msra.mxu0 0.0
        %1476 = vmatpush.msra.mxu0 0.0
        %1477 = vmatpush.msra.mxu0 0.0
        %1478 = vmatpush.msra.mxu0 0.0
        %1479 = vmatpush.msra.mxu0 0.0
        %1480 = vmatpush.msra.mxu0 0.0
        %1481 = vmatpush.msra.mxu0 0.0
        %1482 = vmatpush.msra.mxu0 0.0
        %1483 = vmatpush.msra.mxu0 0.0
        %v1484 = vand.u32 %v411, 4294901760
        %1485 = vmatpush.msra.mxu0 %v1484
        %v1486 = vand.u32 %v413, 4294901760
        %1487 = vmatmul.f32.gmra.mxu0 %v1486
        %v1488 = vpop.f32.mrf.mxu0
        %v1489 = vadd.f32 %v1343, %v1488
        %v1490 = vand.u32 %v416, 4294901760
        %1491 = vmatmul.f32.gmra.mxu0 %v1490
        %v1492 = vpop.f32.mrf.mxu0
        %v1493 = vadd.f32 %v1347, %v1492
        %v1494 = vand.u32 %v419, 4294901760
        %1495 = vmatmul.f32.gmra.mxu0 %v1494
        %v1496 = vpop.f32.mrf.mxu0
        %v1497 = vadd.f32 %v1351, %v1496
        %v1498 = vand.u32 %v422, 4294901760
        %1499 = vmatmul.f32.gmra.mxu0 %v1498
        %v1500 = vpop.f32.mrf.mxu0
        %v1501 = vadd.f32 %v1355, %v1500
        %v1502 = vand.u32 %v425, 4294901760
        %1503 = vmatmul.f32.gmra.mxu0 %v1502
        %v1504 = vpop.f32.mrf.mxu0
        %v1505 = vadd.f32 %v1359, %v1504
        %v1506 = vand.u32 %v428, 4294901760
        %1507 = vmatmul.f32.gmra.mxu0 %v1506
        %v1508 = vpop.f32.mrf.mxu0
        %v1509 = vadd.f32 %v1363, %v1508
        %v1510 = vand.u32 %v431, 4294901760
        %1511 = vmatmul.f32.gmra.mxu0 %v1510
        %v1512 = vpop.f32.mrf.mxu0
        %v1513 = vadd.f32 %v1367, %v1512
        %v1514 = vand.u32 %v434, 4294901760
        %1515 = vmatmul.f32.gmra.mxu0 %v1514
        %v1516 = vpop.f32.mrf.mxu0
        %v1517 = vadd.f32 %v1371, %v1516
        %v1518 = vand.u32 %v437, 4294901760
        %1519 = vmatmul.f32.gmra.mxu0 %v1518
        %v1520 = vpop.f32.mrf.mxu0
        %v1521 = vadd.f32 %v1375, %v1520
        %v1522 = vand.u32 %v440, 4294901760
        %1523 = vmatmul.f32.gmra.mxu0 %v1522
        %v1524 = vpop.f32.mrf.mxu0
        %v1525 = vadd.f32 %v1379, %v1524
        %v1526 = vand.u32 %v443, 4294901760
        %1527 = vmatmul.f32.gmra.mxu0 %v1526
        %v1528 = vpop.f32.mrf.mxu0
        %v1529 = vadd.f32 %v1383, %v1528
        %v1530 = vand.u32 %v446, 4294901760
        %1531 = vmatmul.f32.gmra.mxu0 %v1530
        %v1532 = vpop.f32.mrf.mxu0
        %v1533 = vadd.f32 %v1387, %v1532
        %v1534 = vand.u32 %v449, 4294901760
        %1535 = vmatmul.f32.gmra.mxu0 %v1534
        %v1536 = vpop.f32.mrf.mxu0
        %v1537 = vadd.f32 %v1391, %v1536
        %v1538 = vand.u32 %v452, 4294901760
        %1539 = vmatmul.f32.gmra.mxu0 %v1538
        %v1540 = vpop.f32.mrf.mxu0
        %v1541 = vadd.f32 %v1395, %v1540
        %v1542 = vand.u32 %v455, 4294901760
        %1543 = vmatmul.f32.gmra.mxu0 %v1542
        %v1544 = vpop.f32.mrf.mxu0
        %v1545 = vadd.f32 %v1399, %v1544
        %v1546 = vand.u32 %v458, 4294901760
        %1547 = vmatmul.f32.gmra.mxu0 %v1546
        %v1548 = vpop.f32.mrf.mxu0
        %v1549 = vadd.f32 %v1403, %v1548
        %v1550 = vand.u32 %v461, 4294901760
        %1551 = vmatmul.f32.gmra.mxu0 %v1550
        %v1552 = vpop.f32.mrf.mxu0
        %v1553 = vadd.f32 %v1407, %v1552
        %v1554 = vand.u32 %v464, 4294901760
        %1555 = vmatmul.f32.gmra.mxu0 %v1554
        %v1556 = vpop.f32.mrf.mxu0
        %v1557 = vadd.f32 %v1411, %v1556
        %v1558 = vand.u32 %v467, 4294901760
        %1559 = vmatmul.f32.gmra.mxu0 %v1558
        %v1560 = vpop.f32.mrf.mxu0
        %v1561 = vadd.f32 %v1415, %v1560
        %v1562 = vand.u32 %v470, 4294901760
        %1563 = vmatmul.f32.gmra.mxu0 %v1562
        %v1564 = vpop.f32.mrf.mxu0
        %v1565 = vadd.f32 %v1419, %v1564
        %v1566 = vand.u32 %v473, 4294901760
        %1567 = vmatmul.f32.gmra.mxu0 %v1566
        %v1568 = vpop.f32.mrf.mxu0
        %v1569 = vadd.f32 %v1423, %v1568
        %v1570 = vand.u32 %v476, 4294901760
        %1571 = vmatmul.f32.gmra.mxu0 %v1570
        %v1572 = vpop.f32.mrf.mxu0
        %v1573 = vadd.f32 %v1427, %v1572
        %v1574 = vand.u32 %v479, 4294901760
        %1575 = vmatmul.f32.gmra.mxu0 %v1574
        %v1576 = vpop.f32.mrf.mxu0
        %v1577 = vadd.f32 %v1431, %v1576
        %v1578 = vand.u32 %v482, 4294901760
        %1579 = vmatmul.f32.gmra.mxu0 %v1578
        %v1580 = vpop.f32.mrf.mxu0
        %v1581 = vadd.f32 %v1435, %v1580
        %v1582 = vand.u32 %v485, 4294901760
        %1583 = vmatmul.f32.gmra.mxu0 %v1582
        %v1584 = vpop.f32.mrf.mxu0
        %v1585 = vadd.f32 %v1439, %v1584
        %v1586 = vand.u32 %v488, 4294901760
        %1587 = vmatmul.f32.gmra.mxu0 %v1586
        %v1588 = vpop.f32.mrf.mxu0
        %v1589 = vadd.f32 %v1443, %v1588
        %v1590 = vand.u32 %v491, 4294901760
        %1591 = vmatmul.f32.gmra.mxu0 %v1590
        %v1592 = vpop.f32.mrf.mxu0
        %v1593 = vadd.f32 %v1447, %v1592
        %v1594 = vand.u32 %v494, 4294901760
        %1595 = vmatmul.f32.gmra.mxu0 %v1594
        %v1596 = vpop.f32.mrf.mxu0
        %v1597 = vadd.f32 %v1451, %v1596
        %v1598 = vand.u32 %v497, 4294901760
        %1599 = vmatmul.f32.gmra.mxu0 %v1598
        %v1600 = vpop.f32.mrf.mxu0
        %v1601 = vadd.f32 %v1455, %v1600
        %v1602 = vand.u32 %v500, 4294901760
        %1603 = vmatmul.f32.gmra.mxu0 %v1602
        %v1604 = vpop.f32.mrf.mxu0
        %v1605 = vadd.f32 %v1459, %v1604
        %v1606 = vand.u32 %v503, 4294901760
        %1607 = vmatmul.f32.gmra.mxu0 %v1606
        %v1608 = vpop.f32.mrf.mxu0
        %v1609 = vadd.f32 %v1463, %v1608
        %v1610 = vand.u32 %v506, 4294901760
        %1611 = vmatmul.f32.gmra.mxu0 %v1610
        %v1612 = vpop.f32.mrf.mxu0
        %v1613 = vadd.f32 %v1467, %v1612
        %1614 = vdwg.mxu0
        %v1615 = vld [vmem:[%s2] sm:$0x1]
        %v1617 = vperm.slane %v1615, 0
        %v1619 = vadd.f32 %v317, %v1617
        %v1620 = vadd.f32 %v320, %v1617
        %v1621 = vadd.f32 %v323, %v1617
        %v1622 = vadd.f32 %v326, %v1617
        %v1623 = vadd.f32 %v329, %v1617
        %v1624 = vadd.f32 %v332, %v1617
        %v1625 = vadd.f32 %v335, %v1617
        %v1626 = vadd.f32 %v338, %v1617
        %v1627 = vadd.f32 %v341, %v1617
        %v1628 = vadd.f32 %v344, %v1617
        %v1629 = vadd.f32 %v347, %v1617
        %v1630 = vadd.f32 %v350, %v1617
        %v1631 = vadd.f32 %v353, %v1617
        %v1632 = vadd.f32 %v356, %v1617
        %v1633 = vadd.f32 %v359, %v1617
        %v1634 = vadd.f32 %v362, %v1617
        %v1635 = vadd.f32 %v365, %v1617
        %v1636 = vadd.f32 %v368, %v1617
        %v1637 = vadd.f32 %v371, %v1617
        %v1638 = vadd.f32 %v374, %v1617
        %v1639 = vadd.f32 %v377, %v1617
        %v1640 = vadd.f32 %v380, %v1617
        %v1641 = vadd.f32 %v383, %v1617
        %v1642 = vadd.f32 %v386, %v1617
        %v1643 = vadd.f32 %v389, %v1617
        %v1644 = vadd.f32 %v392, %v1617
        %v1645 = vadd.f32 %v395, %v1617
        %v1646 = vadd.f32 %v398, %v1617
        %v1647 = vadd.f32 %v401, %v1617
        %v1648 = vadd.f32 %v404, %v1617
        %v1649 = vadd.f32 %v407, %v1617
        %v1650 = vadd.f32 %v410, %v1617
        %v1651 = vmul.f32 %v1489, 2.0
        %v1652 = vmul.f32 %v1493, 2.0
        %v1653 = vmul.f32 %v1497, 2.0
        %v1654 = vmul.f32 %v1501, 2.0
        %v1655 = vmul.f32 %v1505, 2.0
        %v1656 = vmul.f32 %v1509, 2.0
        %v1657 = vmul.f32 %v1513, 2.0
        %v1658 = vmul.f32 %v1517, 2.0
        %v1659 = vmul.f32 %v1521, 2.0
        %v1660 = vmul.f32 %v1525, 2.0
        %v1661 = vmul.f32 %v1529, 2.0
        %v1662 = vmul.f32 %v1533, 2.0
        %v1663 = vmul.f32 %v1537, 2.0
        %v1664 = vmul.f32 %v1541, 2.0
        %v1665 = vmul.f32 %v1545, 2.0
        %v1666 = vmul.f32 %v1549, 2.0
        %v1667 = vmul.f32 %v1553, 2.0
        %v1668 = vmul.f32 %v1557, 2.0
        %v1669 = vmul.f32 %v1561, 2.0
        %v1670 = vmul.f32 %v1565, 2.0
        %v1671 = vmul.f32 %v1569, 2.0
        %v1672 = vmul.f32 %v1573, 2.0
        %v1673 = vmul.f32 %v1577, 2.0
        %v1674 = vmul.f32 %v1581, 2.0
        %v1675 = vmul.f32 %v1585, 2.0
        %v1676 = vmul.f32 %v1589, 2.0
        %v1677 = vmul.f32 %v1593, 2.0
        %v1678 = vmul.f32 %v1597, 2.0
        %v1679 = vmul.f32 %v1601, 2.0
        %v1680 = vmul.f32 %v1605, 2.0
        %v1681 = vmul.f32 %v1609, 2.0
        %v1682 = vmul.f32 %v1613, 2.0
        %v1683 = vsub.f32 %v1619, %v1651
        %v1684 = vsub.f32 %v1620, %v1652
        %v1685 = vsub.f32 %v1621, %v1653
        %v1686 = vsub.f32 %v1622, %v1654
        %v1687 = vsub.f32 %v1623, %v1655
        %v1688 = vsub.f32 %v1624, %v1656
        %v1689 = vsub.f32 %v1625, %v1657
        %v1690 = vsub.f32 %v1626, %v1658
        %v1691 = vsub.f32 %v1627, %v1659
        %v1692 = vsub.f32 %v1628, %v1660
        %v1693 = vsub.f32 %v1629, %v1661
        %v1694 = vsub.f32 %v1630, %v1662
        %v1695 = vsub.f32 %v1631, %v1663
        %v1696 = vsub.f32 %v1632, %v1664
        %v1697 = vsub.f32 %v1633, %v1665
        %v1698 = vsub.f32 %v1634, %v1666
        %v1699 = vsub.f32 %v1635, %v1667
        %v1700 = vsub.f32 %v1636, %v1668
        %v1701 = vsub.f32 %v1637, %v1669
        %v1702 = vsub.f32 %v1638, %v1670
        %v1703 = vsub.f32 %v1639, %v1671
        %v1704 = vsub.f32 %v1640, %v1672
        %v1705 = vsub.f32 %v1641, %v1673
        %v1706 = vsub.f32 %v1642, %v1674
        %v1707 = vsub.f32 %v1643, %v1675
        %v1708 = vsub.f32 %v1644, %v1676
        %v1709 = vsub.f32 %v1645, %v1677
        %v1710 = vsub.f32 %v1646, %v1678
        %v1711 = vsub.f32 %v1647, %v1679
        %v1712 = vsub.f32 %v1648, %v1680
        %v1713 = vsub.f32 %v1649, %v1681
        %v1714 = vsub.f32 %v1650, %v1682
        %v1715 = vmax.f32 %v1683, 0.0
        %v1716 = vmax.f32 %v1684, 0.0
        %v1717 = vmax.f32 %v1685, 0.0
        %v1718 = vmax.f32 %v1686, 0.0
        %v1719 = vmax.f32 %v1687, 0.0
        %v1720 = vmax.f32 %v1688, 0.0
        %v1721 = vmax.f32 %v1689, 0.0
        %v1722 = vmax.f32 %v1690, 0.0
        %v1723 = vmax.f32 %v1691, 0.0
        %v1724 = vmax.f32 %v1692, 0.0
        %v1725 = vmax.f32 %v1693, 0.0
        %v1726 = vmax.f32 %v1694, 0.0
        %v1727 = vmax.f32 %v1695, 0.0
        %v1728 = vmax.f32 %v1696, 0.0
        %v1729 = vmax.f32 %v1697, 0.0
        %v1730 = vmax.f32 %v1698, 0.0
        %v1731 = vmax.f32 %v1699, 0.0
        %v1732 = vmax.f32 %v1700, 0.0
        %v1733 = vmax.f32 %v1701, 0.0
        %v1734 = vmax.f32 %v1702, 0.0
        %v1735 = vmax.f32 %v1703, 0.0
        %v1736 = vmax.f32 %v1704, 0.0
        %v1737 = vmax.f32 %v1705, 0.0
        %v1738 = vmax.f32 %v1706, 0.0
        %v1739 = vmax.f32 %v1707, 0.0
        %v1740 = vmax.f32 %v1708, 0.0
        %v1741 = vmax.f32 %v1709, 0.0
        %v1742 = vmax.f32 %v1710, 0.0
        %v1743 = vmax.f32 %v1711, 0.0
        %v1744 = vmax.f32 %v1712, 0.0
        %v1745 = vmax.f32 %v1713, 0.0
        %v1746 = vmax.f32 %v1714, 0.0
        %v1747 = vrsqrt.pop %v1715
        %v1748 = vmul.f32 %v1747, %v1715
        %v1749 = vmul.f32 %v1748, %v1747
        %v1750 = vmul.f32 0.5, %v1749
        %v1751 = vsub.f32 1.5, %v1750
        %v1752 = vmul.f32 %v1747, %v1751
        %v1753 = vmul.f32 %v1715, %v1752
        %vm1754 = vcmp.eq.f32.partialorder %v1715, inf
        %v1755 = vsel %vm1754, %v1715, %v1753
        %vm1756 = vcmp.eq.f32.partialorder %v1715, 0.0
        %v1757 = vand.u32 %v1715, 2147483648
        %v1758 = vsel %vm1756, %v1757, %v1755
        %v1759 = vrsqrt.pop %v1716
        %v1760 = vmul.f32 %v1759, %v1716
        %v1761 = vmul.f32 %v1760, %v1759
        %v1762 = vmul.f32 0.5, %v1761
        %v1763 = vsub.f32 1.5, %v1762
        %v1764 = vmul.f32 %v1759, %v1763
        %v1765 = vmul.f32 %v1716, %v1764
        %vm1766 = vcmp.eq.f32.partialorder %v1716, inf
        %v1767 = vsel %vm1766, %v1716, %v1765
        %vm1768 = vcmp.eq.f32.partialorder %v1716, 0.0
        %v1769 = vand.u32 %v1716, 2147483648
        %v1770 = vsel %vm1768, %v1769, %v1767
        %v1771 = vrsqrt.pop %v1717
        %v1772 = vmul.f32 %v1771, %v1717
        %v1773 = vmul.f32 %v1772, %v1771
        %v1774 = vmul.f32 0.5, %v1773
        %v1775 = vsub.f32 1.5, %v1774
        %v1776 = vmul.f32 %v1771, %v1775
        %v1777 = vmul.f32 %v1717, %v1776
        %vm1778 = vcmp.eq.f32.partialorder %v1717, inf
        %v1779 = vsel %vm1778, %v1717, %v1777
        %vm1780 = vcmp.eq.f32.partialorder %v1717, 0.0
        %v1781 = vand.u32 %v1717, 2147483648
        %v1782 = vsel %vm1780, %v1781, %v1779
        %v1783 = vrsqrt.pop %v1718
        %v1784 = vmul.f32 %v1783, %v1718
        %v1785 = vmul.f32 %v1784, %v1783
        %v1786 = vmul.f32 0.5, %v1785
        %v1787 = vsub.f32 1.5, %v1786
        %v1788 = vmul.f32 %v1783, %v1787
        %v1789 = vmul.f32 %v1718, %v1788
        %vm1790 = vcmp.eq.f32.partialorder %v1718, inf
        %v1791 = vsel %vm1790, %v1718, %v1789
        %vm1792 = vcmp.eq.f32.partialorder %v1718, 0.0
        %v1793 = vand.u32 %v1718, 2147483648
        %v1794 = vsel %vm1792, %v1793, %v1791
        %v1795 = vrsqrt.pop %v1719
        %v1796 = vmul.f32 %v1795, %v1719
        %v1797 = vmul.f32 %v1796, %v1795
        %v1798 = vmul.f32 0.5, %v1797
        %v1799 = vsub.f32 1.5, %v1798
        %v1800 = vmul.f32 %v1795, %v1799
        %v1801 = vmul.f32 %v1719, %v1800
        %vm1802 = vcmp.eq.f32.partialorder %v1719, inf
        %v1803 = vsel %vm1802, %v1719, %v1801
        %vm1804 = vcmp.eq.f32.partialorder %v1719, 0.0
        %v1805 = vand.u32 %v1719, 2147483648
        %v1806 = vsel %vm1804, %v1805, %v1803
        %v1807 = vrsqrt.pop %v1720
        %v1808 = vmul.f32 %v1807, %v1720
        %v1809 = vmul.f32 %v1808, %v1807
        %v1810 = vmul.f32 0.5, %v1809
        %v1811 = vsub.f32 1.5, %v1810
        %v1812 = vmul.f32 %v1807, %v1811
        %v1813 = vmul.f32 %v1720, %v1812
        %vm1814 = vcmp.eq.f32.partialorder %v1720, inf
        %v1815 = vsel %vm1814, %v1720, %v1813
        %vm1816 = vcmp.eq.f32.partialorder %v1720, 0.0
        %v1817 = vand.u32 %v1720, 2147483648
        %v1818 = vsel %vm1816, %v1817, %v1815
        %v1819 = vrsqrt.pop %v1721
        %v1820 = vmul.f32 %v1819, %v1721
        %v1821 = vmul.f32 %v1820, %v1819
        %v1822 = vmul.f32 0.5, %v1821
        %v1823 = vsub.f32 1.5, %v1822
        %v1824 = vmul.f32 %v1819, %v1823
        %v1825 = vmul.f32 %v1721, %v1824
        %vm1826 = vcmp.eq.f32.partialorder %v1721, inf
        %v1827 = vsel %vm1826, %v1721, %v1825
        %vm1828 = vcmp.eq.f32.partialorder %v1721, 0.0
        %v1829 = vand.u32 %v1721, 2147483648
        %v1830 = vsel %vm1828, %v1829, %v1827
        %v1831 = vrsqrt.pop %v1722
        %v1832 = vmul.f32 %v1831, %v1722
        %v1833 = vmul.f32 %v1832, %v1831
        %v1834 = vmul.f32 0.5, %v1833
        %v1835 = vsub.f32 1.5, %v1834
        %v1836 = vmul.f32 %v1831, %v1835
        %v1837 = vmul.f32 %v1722, %v1836
        %vm1838 = vcmp.eq.f32.partialorder %v1722, inf
        %v1839 = vsel %vm1838, %v1722, %v1837
        %vm1840 = vcmp.eq.f32.partialorder %v1722, 0.0
        %v1841 = vand.u32 %v1722, 2147483648
        %v1842 = vsel %vm1840, %v1841, %v1839
        %v1843 = vrsqrt.pop %v1723
        %v1844 = vmul.f32 %v1843, %v1723
        %v1845 = vmul.f32 %v1844, %v1843
        %v1846 = vmul.f32 0.5, %v1845
        %v1847 = vsub.f32 1.5, %v1846
        %v1848 = vmul.f32 %v1843, %v1847
        %v1849 = vmul.f32 %v1723, %v1848
        %vm1850 = vcmp.eq.f32.partialorder %v1723, inf
        %v1851 = vsel %vm1850, %v1723, %v1849
        %vm1852 = vcmp.eq.f32.partialorder %v1723, 0.0
        %v1853 = vand.u32 %v1723, 2147483648
        %v1854 = vsel %vm1852, %v1853, %v1851
        %v1855 = vrsqrt.pop %v1724
        %v1856 = vmul.f32 %v1855, %v1724
        %v1857 = vmul.f32 %v1856, %v1855
        %v1858 = vmul.f32 0.5, %v1857
        %v1859 = vsub.f32 1.5, %v1858
        %v1860 = vmul.f32 %v1855, %v1859
        %v1861 = vmul.f32 %v1724, %v1860
        %vm1862 = vcmp.eq.f32.partialorder %v1724, inf
        %v1863 = vsel %vm1862, %v1724, %v1861
        %vm1864 = vcmp.eq.f32.partialorder %v1724, 0.0
        %v1865 = vand.u32 %v1724, 2147483648
        %v1866 = vsel %vm1864, %v1865, %v1863
        %v1867 = vrsqrt.pop %v1725
        %v1868 = vmul.f32 %v1867, %v1725
        %v1869 = vmul.f32 %v1868, %v1867
        %v1870 = vmul.f32 0.5, %v1869
        %v1871 = vsub.f32 1.5, %v1870
        %v1872 = vmul.f32 %v1867, %v1871
        %v1873 = vmul.f32 %v1725, %v1872
        %vm1874 = vcmp.eq.f32.partialorder %v1725, inf
        %v1875 = vsel %vm1874, %v1725, %v1873
        %vm1876 = vcmp.eq.f32.partialorder %v1725, 0.0
        %v1877 = vand.u32 %v1725, 2147483648
        %v1878 = vsel %vm1876, %v1877, %v1875
        %v1879 = vrsqrt.pop %v1726
        %v1880 = vmul.f32 %v1879, %v1726
        %v1881 = vmul.f32 %v1880, %v1879
        %v1882 = vmul.f32 0.5, %v1881
        %v1883 = vsub.f32 1.5, %v1882
        %v1884 = vmul.f32 %v1879, %v1883
        %v1885 = vmul.f32 %v1726, %v1884
        %vm1886 = vcmp.eq.f32.partialorder %v1726, inf
        %v1887 = vsel %vm1886, %v1726, %v1885
        %vm1888 = vcmp.eq.f32.partialorder %v1726, 0.0
        %v1889 = vand.u32 %v1726, 2147483648
        %v1890 = vsel %vm1888, %v1889, %v1887
        %v1891 = vrsqrt.pop %v1727
        %v1892 = vmul.f32 %v1891, %v1727
        %v1893 = vmul.f32 %v1892, %v1891
        %v1894 = vmul.f32 0.5, %v1893
        %v1895 = vsub.f32 1.5, %v1894
        %v1896 = vmul.f32 %v1891, %v1895
        %v1897 = vmul.f32 %v1727, %v1896
        %vm1898 = vcmp.eq.f32.partialorder %v1727, inf
        %v1899 = vsel %vm1898, %v1727, %v1897
        %vm1900 = vcmp.eq.f32.partialorder %v1727, 0.0
        %v1901 = vand.u32 %v1727, 2147483648
        %v1902 = vsel %vm1900, %v1901, %v1899
        %v1903 = vrsqrt.pop %v1728
        %v1904 = vmul.f32 %v1903, %v1728
        %v1905 = vmul.f32 %v1904, %v1903
        %v1906 = vmul.f32 0.5, %v1905
        %v1907 = vsub.f32 1.5, %v1906
        %v1908 = vmul.f32 %v1903, %v1907
        %v1909 = vmul.f32 %v1728, %v1908
        %vm1910 = vcmp.eq.f32.partialorder %v1728, inf
        %v1911 = vsel %vm1910, %v1728, %v1909
        %vm1912 = vcmp.eq.f32.partialorder %v1728, 0.0
        %v1913 = vand.u32 %v1728, 2147483648
        %v1914 = vsel %vm1912, %v1913, %v1911
        %v1915 = vrsqrt.pop %v1729
        %v1916 = vmul.f32 %v1915, %v1729
        %v1917 = vmul.f32 %v1916, %v1915
        %v1918 = vmul.f32 0.5, %v1917
        %v1919 = vsub.f32 1.5, %v1918
        %v1920 = vmul.f32 %v1915, %v1919
        %v1921 = vmul.f32 %v1729, %v1920
        %vm1922 = vcmp.eq.f32.partialorder %v1729, inf
        %v1923 = vsel %vm1922, %v1729, %v1921
        %vm1924 = vcmp.eq.f32.partialorder %v1729, 0.0
        %v1925 = vand.u32 %v1729, 2147483648
        %v1926 = vsel %vm1924, %v1925, %v1923
        %v1927 = vrsqrt.pop %v1730
        %v1928 = vmul.f32 %v1927, %v1730
        %v1929 = vmul.f32 %v1928, %v1927
        %v1930 = vmul.f32 0.5, %v1929
        %v1931 = vsub.f32 1.5, %v1930
        %v1932 = vmul.f32 %v1927, %v1931
        %v1933 = vmul.f32 %v1730, %v1932
        %vm1934 = vcmp.eq.f32.partialorder %v1730, inf
        %v1935 = vsel %vm1934, %v1730, %v1933
        %vm1936 = vcmp.eq.f32.partialorder %v1730, 0.0
        %v1937 = vand.u32 %v1730, 2147483648
        %v1938 = vsel %vm1936, %v1937, %v1935
        %v1939 = vrsqrt.pop %v1731
        %v1940 = vmul.f32 %v1939, %v1731
        %v1941 = vmul.f32 %v1940, %v1939
        %v1942 = vmul.f32 0.5, %v1941
        %v1943 = vsub.f32 1.5, %v1942
        %v1944 = vmul.f32 %v1939, %v1943
        %v1945 = vmul.f32 %v1731, %v1944
        %vm1946 = vcmp.eq.f32.partialorder %v1731, inf
        %v1947 = vsel %vm1946, %v1731, %v1945
        %vm1948 = vcmp.eq.f32.partialorder %v1731, 0.0
        %v1949 = vand.u32 %v1731, 2147483648
        %v1950 = vsel %vm1948, %v1949, %v1947
        %v1951 = vrsqrt.pop %v1732
        %v1952 = vmul.f32 %v1951, %v1732
        %v1953 = vmul.f32 %v1952, %v1951
        %v1954 = vmul.f32 0.5, %v1953
        %v1955 = vsub.f32 1.5, %v1954
        %v1956 = vmul.f32 %v1951, %v1955
        %v1957 = vmul.f32 %v1732, %v1956
        %vm1958 = vcmp.eq.f32.partialorder %v1732, inf
        %v1959 = vsel %vm1958, %v1732, %v1957
        %vm1960 = vcmp.eq.f32.partialorder %v1732, 0.0
        %v1961 = vand.u32 %v1732, 2147483648
        %v1962 = vsel %vm1960, %v1961, %v1959
        %v1963 = vrsqrt.pop %v1733
        %v1964 = vmul.f32 %v1963, %v1733
        %v1965 = vmul.f32 %v1964, %v1963
        %v1966 = vmul.f32 0.5, %v1965
        %v1967 = vsub.f32 1.5, %v1966
        %v1968 = vmul.f32 %v1963, %v1967
        %v1969 = vmul.f32 %v1733, %v1968
        %vm1970 = vcmp.eq.f32.partialorder %v1733, inf
        %v1971 = vsel %vm1970, %v1733, %v1969
        %vm1972 = vcmp.eq.f32.partialorder %v1733, 0.0
        %v1973 = vand.u32 %v1733, 2147483648
        %v1974 = vsel %vm1972, %v1973, %v1971
        %v1975 = vrsqrt.pop %v1734
        %v1976 = vmul.f32 %v1975, %v1734
        %v1977 = vmul.f32 %v1976, %v1975
        %v1978 = vmul.f32 0.5, %v1977
        %v1979 = vsub.f32 1.5, %v1978
        %v1980 = vmul.f32 %v1975, %v1979
        %v1981 = vmul.f32 %v1734, %v1980
        %vm1982 = vcmp.eq.f32.partialorder %v1734, inf
        %v1983 = vsel %vm1982, %v1734, %v1981
        %vm1984 = vcmp.eq.f32.partialorder %v1734, 0.0
        %v1985 = vand.u32 %v1734, 2147483648
        %v1986 = vsel %vm1984, %v1985, %v1983
        %v1987 = vrsqrt.pop %v1735
        %v1988 = vmul.f32 %v1987, %v1735
        %v1989 = vmul.f32 %v1988, %v1987
        %v1990 = vmul.f32 0.5, %v1989
        %v1991 = vsub.f32 1.5, %v1990
        %v1992 = vmul.f32 %v1987, %v1991
        %v1993 = vmul.f32 %v1735, %v1992
        %vm1994 = vcmp.eq.f32.partialorder %v1735, inf
        %v1995 = vsel %vm1994, %v1735, %v1993
        %vm1996 = vcmp.eq.f32.partialorder %v1735, 0.0
        %v1997 = vand.u32 %v1735, 2147483648
        %v1998 = vsel %vm1996, %v1997, %v1995
        %v1999 = vrsqrt.pop %v1736
        %v2000 = vmul.f32 %v1999, %v1736
        %v2001 = vmul.f32 %v2000, %v1999
        %v2002 = vmul.f32 0.5, %v2001
        %v2003 = vsub.f32 1.5, %v2002
        %v2004 = vmul.f32 %v1999, %v2003
        %v2005 = vmul.f32 %v1736, %v2004
        %vm2006 = vcmp.eq.f32.partialorder %v1736, inf
        %v2007 = vsel %vm2006, %v1736, %v2005
        %vm2008 = vcmp.eq.f32.partialorder %v1736, 0.0
        %v2009 = vand.u32 %v1736, 2147483648
        %v2010 = vsel %vm2008, %v2009, %v2007
        %v2011 = vrsqrt.pop %v1737
        %v2012 = vmul.f32 %v2011, %v1737
        %v2013 = vmul.f32 %v2012, %v2011
        %v2014 = vmul.f32 0.5, %v2013
        %v2015 = vsub.f32 1.5, %v2014
        %v2016 = vmul.f32 %v2011, %v2015
        %v2017 = vmul.f32 %v1737, %v2016
        %vm2018 = vcmp.eq.f32.partialorder %v1737, inf
        %v2019 = vsel %vm2018, %v1737, %v2017
        %vm2020 = vcmp.eq.f32.partialorder %v1737, 0.0
        %v2021 = vand.u32 %v1737, 2147483648
        %v2022 = vsel %vm2020, %v2021, %v2019
        %v2023 = vrsqrt.pop %v1738
        %v2024 = vmul.f32 %v2023, %v1738
        %v2025 = vmul.f32 %v2024, %v2023
        %v2026 = vmul.f32 0.5, %v2025
        %v2027 = vsub.f32 1.5, %v2026
        %v2028 = vmul.f32 %v2023, %v2027
        %v2029 = vmul.f32 %v1738, %v2028
        %vm2030 = vcmp.eq.f32.partialorder %v1738, inf
        %v2031 = vsel %vm2030, %v1738, %v2029
        %vm2032 = vcmp.eq.f32.partialorder %v1738, 0.0
        %v2033 = vand.u32 %v1738, 2147483648
        %v2034 = vsel %vm2032, %v2033, %v2031
        %v2035 = vrsqrt.pop %v1739
        %v2036 = vmul.f32 %v2035, %v1739
        %v2037 = vmul.f32 %v2036, %v2035
        %v2038 = vmul.f32 0.5, %v2037
        %v2039 = vsub.f32 1.5, %v2038
        %v2040 = vmul.f32 %v2035, %v2039
        %v2041 = vmul.f32 %v1739, %v2040
        %vm2042 = vcmp.eq.f32.partialorder %v1739, inf
        %v2043 = vsel %vm2042, %v1739, %v2041
        %vm2044 = vcmp.eq.f32.partialorder %v1739, 0.0
        %v2045 = vand.u32 %v1739, 2147483648
        %v2046 = vsel %vm2044, %v2045, %v2043
        %v2047 = vrsqrt.pop %v1740
        %v2048 = vmul.f32 %v2047, %v1740
        %v2049 = vmul.f32 %v2048, %v2047
        %v2050 = vmul.f32 0.5, %v2049
        %v2051 = vsub.f32 1.5, %v2050
        %v2052 = vmul.f32 %v2047, %v2051
        %v2053 = vmul.f32 %v1740, %v2052
        %vm2054 = vcmp.eq.f32.partialorder %v1740, inf
        %v2055 = vsel %vm2054, %v1740, %v2053
        %vm2056 = vcmp.eq.f32.partialorder %v1740, 0.0
        %v2057 = vand.u32 %v1740, 2147483648
        %v2058 = vsel %vm2056, %v2057, %v2055
        %v2059 = vrsqrt.pop %v1741
        %v2060 = vmul.f32 %v2059, %v1741
        %v2061 = vmul.f32 %v2060, %v2059
        %v2062 = vmul.f32 0.5, %v2061
        %v2063 = vsub.f32 1.5, %v2062
        %v2064 = vmul.f32 %v2059, %v2063
        %v2065 = vmul.f32 %v1741, %v2064
        %vm2066 = vcmp.eq.f32.partialorder %v1741, inf
        %v2067 = vsel %vm2066, %v1741, %v2065
        %vm2068 = vcmp.eq.f32.partialorder %v1741, 0.0
        %v2069 = vand.u32 %v1741, 2147483648
        %v2070 = vsel %vm2068, %v2069, %v2067
        %v2071 = vrsqrt.pop %v1742
        %v2072 = vmul.f32 %v2071, %v1742
        %v2073 = vmul.f32 %v2072, %v2071
        %v2074 = vmul.f32 0.5, %v2073
        %v2075 = vsub.f32 1.5, %v2074
        %v2076 = vmul.f32 %v2071, %v2075
        %v2077 = vmul.f32 %v1742, %v2076
        %vm2078 = vcmp.eq.f32.partialorder %v1742, inf
        %v2079 = vsel %vm2078, %v1742, %v2077
        %vm2080 = vcmp.eq.f32.partialorder %v1742, 0.0
        %v2081 = vand.u32 %v1742, 2147483648
        %v2082 = vsel %vm2080, %v2081, %v2079
        %v2083 = vrsqrt.pop %v1743
        %v2084 = vmul.f32 %v2083, %v1743
        %v2085 = vmul.f32 %v2084, %v2083
        %v2086 = vmul.f32 0.5, %v2085
        %v2087 = vsub.f32 1.5, %v2086
        %v2088 = vmul.f32 %v2083, %v2087
        %v2089 = vmul.f32 %v1743, %v2088
        %vm2090 = vcmp.eq.f32.partialorder %v1743, inf
        %v2091 = vsel %vm2090, %v1743, %v2089
        %vm2092 = vcmp.eq.f32.partialorder %v1743, 0.0
        %v2093 = vand.u32 %v1743, 2147483648
        %v2094 = vsel %vm2092, %v2093, %v2091
        %v2095 = vrsqrt.pop %v1744
        %v2096 = vmul.f32 %v2095, %v1744
        %v2097 = vmul.f32 %v2096, %v2095
        %v2098 = vmul.f32 0.5, %v2097
        %v2099 = vsub.f32 1.5, %v2098
        %v2100 = vmul.f32 %v2095, %v2099
        %v2101 = vmul.f32 %v1744, %v2100
        %vm2102 = vcmp.eq.f32.partialorder %v1744, inf
        %v2103 = vsel %vm2102, %v1744, %v2101
        %vm2104 = vcmp.eq.f32.partialorder %v1744, 0.0
        %v2105 = vand.u32 %v1744, 2147483648
        %v2106 = vsel %vm2104, %v2105, %v2103
        %v2107 = vrsqrt.pop %v1745
        %v2108 = vmul.f32 %v2107, %v1745
        %v2109 = vmul.f32 %v2108, %v2107
        %v2110 = vmul.f32 0.5, %v2109
        %v2111 = vsub.f32 1.5, %v2110
        %v2112 = vmul.f32 %v2107, %v2111
        %v2113 = vmul.f32 %v1745, %v2112
        %vm2114 = vcmp.eq.f32.partialorder %v1745, inf
        %v2115 = vsel %vm2114, %v1745, %v2113
        %vm2116 = vcmp.eq.f32.partialorder %v1745, 0.0
        %v2117 = vand.u32 %v1745, 2147483648
        %v2118 = vsel %vm2116, %v2117, %v2115
        %v2119 = vrsqrt.pop %v1746
        %v2120 = vmul.f32 %v2119, %v1746
        %v2121 = vmul.f32 %v2120, %v2119
        %v2122 = vmul.f32 0.5, %v2121
        %v2123 = vsub.f32 1.5, %v2122
        %v2124 = vmul.f32 %v2119, %v2123
        %v2125 = vmul.f32 %v1746, %v2124
        %vm2126 = vcmp.eq.f32.partialorder %v1746, inf
        %v2127 = vsel %vm2126, %v1746, %v2125
        %vm2128 = vcmp.eq.f32.partialorder %v1746, 0.0
        %v2129 = vand.u32 %v1746, 2147483648
        %v2130 = vsel %vm2128, %v2129, %v2127
        %v2131 = vld [vmem:[%s242] sm:$0xff]
        %v2132 = vld [vmem:[%s242 + $0x8] sm:$0xff]
        %v2133 = vld [vmem:[%s242 + $0x10] sm:$0xff]
        %v2134 = vld [vmem:[%s242 + $0x18] sm:$0xff]
        %v2135 = vld [vmem:[%s242 + $0x20] sm:$0xff]
        %v2136 = vld [vmem:[%s242 + $0x28] sm:$0xff]
        %v2137 = vld [vmem:[%s242 + $0x30] sm:$0xff]
        %v2138 = vld [vmem:[%s242 + $0x38] sm:$0xff]
        %v2139 = vld [vmem:[%s242 + $0x40] sm:$0xff]
        %v2140 = vld [vmem:[%s242 + $0x48] sm:$0xff]
        %v2141 = vld [vmem:[%s242 + $0x50] sm:$0xff]
        %v2142 = vld [vmem:[%s242 + $0x58] sm:$0xff]
        %v2143 = vld [vmem:[%s242 + $0x60] sm:$0xff]
        %v2144 = vld [vmem:[%s242 + $0x68] sm:$0xff]
        %v2145 = vld [vmem:[%s242 + $0x70] sm:$0xff]
        %v2146 = vld [vmem:[%s242 + $0x78] sm:$0xff]
        %v2147 = vld [vmem:[%s242 + $0x80] sm:$0xff]
        %v2148 = vld [vmem:[%s242 + $0x88] sm:$0xff]
        %v2149 = vld [vmem:[%s242 + $0x90] sm:$0xff]
        %v2150 = vld [vmem:[%s242 + $0x98] sm:$0xff]
        %v2151 = vld [vmem:[%s242 + $0xa0] sm:$0xff]
        %v2152 = vld [vmem:[%s242 + $0xa8] sm:$0xff]
        %v2153 = vld [vmem:[%s242 + $0xb0] sm:$0xff]
        %v2154 = vld [vmem:[%s242 + $0xb8] sm:$0xff]
        %v2155 = vld [vmem:[%s242 + $0xc0] sm:$0xff]
        %v2156 = vld [vmem:[%s242 + $0xc8] sm:$0xff]
        %v2157 = vld [vmem:[%s242 + $0xd0] sm:$0xff]
        %v2158 = vld [vmem:[%s242 + $0xd8] sm:$0xff]
        %v2159 = vld [vmem:[%s242 + $0xe0] sm:$0xff]
        %v2160 = vld [vmem:[%s242 + $0xe8] sm:$0xff]
        %v2161 = vld [vmem:[%s242 + $0xf0] sm:$0xff]
        %v2162 = vld [vmem:[%s242 + $0xf8] sm:$0xff]
        %v2163 = vmul.f32 %v2131, %v1758
        %v2164 = vmul.f32 %v2132, %v1770
        %v2165 = vmul.f32 %v2133, %v1782
        %v2166 = vmul.f32 %v2134, %v1794
        %v2167 = vmul.f32 %v2135, %v1806
        %v2168 = vmul.f32 %v2136, %v1818
        %v2169 = vmul.f32 %v2137, %v1830
        %v2170 = vmul.f32 %v2138, %v1842
        %v2171 = vmul.f32 %v2139, %v1854
        %v2172 = vmul.f32 %v2140, %v1866
        %v2173 = vmul.f32 %v2141, %v1878
        %v2174 = vmul.f32 %v2142, %v1890
        %v2175 = vmul.f32 %v2143, %v1902
        %v2176 = vmul.f32 %v2144, %v1914
        %v2177 = vmul.f32 %v2145, %v1926
        %v2178 = vmul.f32 %v2146, %v1938
        %v2179 = vmul.f32 %v2147, %v1950
        %v2180 = vmul.f32 %v2148, %v1962
        %v2181 = vmul.f32 %v2149, %v1974
        %v2182 = vmul.f32 %v2150, %v1986
        %v2183 = vmul.f32 %v2151, %v1998
        %v2184 = vmul.f32 %v2152, %v2010
        %v2185 = vmul.f32 %v2153, %v2022
        %v2186 = vmul.f32 %v2154, %v2034
        %v2187 = vmul.f32 %v2155, %v2046
        %v2188 = vmul.f32 %v2156, %v2058
        %v2189 = vmul.f32 %v2157, %v2070
        %v2190 = vmul.f32 %v2158, %v2082
        %v2191 = vmul.f32 %v2159, %v2094
        %v2192 = vmul.f32 %v2160, %v2106
        %v2193 = vmul.f32 %v2161, %v2118
        %v2194 = vmul.f32 %v2162, %v2130
        %v2195 = vmax.f32 %v2163, %v2167
        %v2196 = vmax.f32 %v2164, %v2168
        %v2197 = vmax.f32 %v2165, %v2169
        %v2198 = vmax.f32 %v2166, %v2170
        %v2199 = vmax.f32 %v2195, %v2171
        %v2200 = vmax.f32 %v2196, %v2172
        %v2201 = vmax.f32 %v2197, %v2173
        %v2202 = vmax.f32 %v2198, %v2174
        %v2203 = vmax.f32 %v2199, %v2175
        %v2204 = vmax.f32 %v2200, %v2176
        %v2205 = vmax.f32 %v2201, %v2177
        %v2206 = vmax.f32 %v2202, %v2178
        %v2207 = vmax.f32 %v2203, %v2179
        %v2208 = vmax.f32 %v2204, %v2180
        %v2209 = vmax.f32 %v2205, %v2181
        %v2210 = vmax.f32 %v2206, %v2182
        %v2211 = vmax.f32 %v2207, %v2183
        %v2212 = vmax.f32 %v2208, %v2184
        %v2213 = vmax.f32 %v2209, %v2185
        %v2214 = vmax.f32 %v2210, %v2186
        %v2215 = vmax.f32 %v2211, %v2187
        %v2216 = vmax.f32 %v2212, %v2188
        %v2217 = vmax.f32 %v2213, %v2189
        %v2218 = vmax.f32 %v2214, %v2190
        %v2219 = vmax.f32 %v2215, %v2191
        %v2220 = vmax.f32 %v2216, %v2192
        %v2221 = vmax.f32 %v2217, %v2193
        %v2222 = vmax.f32 %v2218, %v2194
        %v2223 = vmax.f32 %v2219, %v2220
        %v2224 = vmax.f32 %v2221, %v2222
        %v2225 = vmax.f32 %v2223, %v2224
        %v2226 = vrot.slane %v2225, 4
        %v2227 = vmax.f32 %v2225, %v2226
        %v2228 = vrot.slane %v2227, 2
        %v2229 = vmax.f32 %v2227, %v2228
        %v2230 = vrot.slane %v2229, 1
        %v2231 = vmax.f32 %v2229, %v2230
        %v2232 = vld [vmem:[%s228] sm:$0x1]
        %v2233 = vmax.f32 %v2232, %v2231
        %2234 = vst [vmem:[%s228] sm:$0x1] %v2233
        %s2235 = sand.u32 %s136, 1
        %s2236 = scalar_lea.sflag [#allocation3], %s2235
        %s2237 = sand.u32 %s136, 1
        %s2238 = scalar_lea.vmem [#allocation2], %s2237
        // Predicated region
        $region41: #{tpu_custom_call.1} parent=35 // pred_check
          %p2239 = pneg %p146
        $region42: #{tpu_custom_call.1} parent=35 // pred_check_branch
          %2241 = sbr.rel (%p2239) target = $region44
        $region43: #{tpu_custom_call.1} parent=35 // pred_region
          %2243 = vsyncadd %s2236, 0
          %s2244 = scalar_lea.hbm %s4, %s22
          %s2246 = sshll.u32 %s2238, 4
          %s2247 = int_to_ptr.vmem [resolvable:$true] %s2246
          %s2248 = sshll.u32 %s2244, 4
          %s2249 = int_to_ptr.hbm [resolvable:$true] %s2248
          %2251 = dma.vmem_to_hbm [thread:$0]  %s2247, 16, %s2249, %s2236
        $region44: #{tpu_custom_call.1} parent=35 // pred_fallthru
          _
      $region36: #{tpu_custom_call.1} parent=5 // pred_fallthru
        _
      %p2252 = scmp.le.s32.totalorder 2, %s13
      // Predicated region
      $region45: #{tpu_custom_call.1} parent=5 // pred_check
        %p2253 = pneg %p2252
      $region46: #{tpu_custom_call.1} parent=5 // pred_check_branch
        %2255 = sbr.rel (%p2253) target = $region48
      $region47: #{tpu_custom_call.1} parent=5 // pred_region
        %s2256 = ssub.s32 %s13, 2
        // Predicated region
        $region49: #{tpu_custom_call.1} parent=47 // pred_check
          %p2257 = pneg %p152
        $region50: #{tpu_custom_call.1} parent=47 // pred_check_branch
          %2259 = sbr.rel (%p2257) target = $region52
        $region51: #{tpu_custom_call.1} parent=47 // pred_region
          %s2260 = sand.u32 %s137, 1
          %s2261 = scalar_lea.sflag [#allocation3], %s2260
          %s2262 = sand.u32 %s137, 1
          %s2263 = scalar_lea.vmem [#allocation2], %s2262
          %2265 = dma.done %s2261, 16
        $region52: #{tpu_custom_call.1} parent=47 // pred_fallthru
          _
      $region48: #{tpu_custom_call.1} parent=5 // pred_fallthru
        _
    $region6: #{tpu_custom_call.1} parent=1 // loop_footer
      %s17 = sadd.s32 1, %s13
    $region7: #{tpu_custom_call.1} parent=1 // loop_footer_branch
      %12 = sbr.rel target = $region3
    $region8: #{tpu_custom_call.1} parent=1 // loop_exit
      _
    %2266 = vsyncpa [#allocation3], 1
    %s2267 = scalar_lea.sflag [#allocation3], 1
    %2268 = vsyncpa %s2267, 1

</llo_original>
